<compile_context>
chip_gen: v7x
topology: tpu7x:2x2x1
jax: 0.10.0
libtpu: 0.0.40
codegen_flags: <defaults>
</compile_context>

<pallas_src>
from functools import partial

import jax
import jax.numpy as jnp
from jax.experimental import pallas as pl
from jax.experimental.pallas import tpu as pltpu

# constants from the PyTorch module
NUM_BOND_TYPE = 6
NUM_BOND_DIRECTION = 3
NUM_ATOM_TYPE = 120
NUM_CHIRALITY_TAG = 3
BN_EPS = 1e-5
LANE = 128


def _round_up(x, m):
    return ((x + m - 1) // m) * m


def _pad2d(x, rows, cols):
    out = jnp.zeros((rows, cols), x.dtype)
    return out.at[: x.shape[0], : x.shape[1]].set(x)


# ---------------------------------------------------------------------------
# Fused Pallas kernel: all GIN layers + mean-pool + prediction head
# ---------------------------------------------------------------------------

def fused_gnn_kernel(a_hbm, eagg_ref, w1_ref, b1_ref, w2_ref, b2_ref,
                     gamma_ref, beta_ref, h0_ref, p_ref, inv_ref, wp_ref,
                     bp_ref, out_ref, a_sc, h_sc, dma_sem,
                     *, n_valid, num_layer):
    l = pl.program_id(0)          # layer axis (sequential / "arbitrary")

    # One-time setup: DMA the dense (block-diagonal) adjacency from HBM into
    # a single-buffered VMEM scratch exactly once, and load the initial bf16
    # node embeddings into the resident feature scratch.
    @pl.when(l == 0)
    def _():
        cp = pltpu.make_async_copy(a_hbm, a_sc, dma_sem)
        cp.start()
        h_sc[...] = h0_ref[...]
        cp.wait()

    # GIN aggregation: per-dst edge-embedding seed + A @ h (bf16 MXU, f32 acc)
    aggr = eagg_ref[...] + jnp.dot(a_sc[...], h_sc[...],
                                   preferred_element_type=jnp.float32)

    # GIN MLP: Linear(D, 2D) -> ReLU -> Linear(2D, D)
    t = jnp.dot(aggr.astype(jnp.bfloat16), w1_ref[...],
                preferred_element_type=jnp.float32) + b1_ref[...]
    t = jnp.maximum(t, 0.0)
    h2 = jnp.dot(t.astype(jnp.bfloat16), w2_ref[...],
                 preferred_element_type=jnp.float32) + b2_ref[...]

    # BatchNorm1d with training-mode batch statistics over the n_valid real
    # nodes only (padded rows are masked out of the statistics).
    npad = h2.shape[0]
    mask = (jax.lax.broadcasted_iota(jnp.int32, (npad, 1), 0) < n_valid
            ).astype(jnp.float32)
    inv_n = 1.0 / float(n_valid)
    mean = jnp.sum(h2 * mask, axis=0, keepdims=True) * inv_n
    var = jnp.sum(((h2 - mean) ** 2) * mask, axis=0, keepdims=True) * inv_n
    hn = (h2 - mean) * jax.lax.rsqrt(var + BN_EPS) * gamma_ref[...] + beta_ref[...]

    # F.relu on all but the last layer (drop_ratio=0 -> dropout = identity)
    hn = jnp.where(l == num_layer - 1, hn, jnp.maximum(hn, 0.0))
    h_sc[...] = (hn * mask).astype(jnp.bfloat16)

    # Last layer: global_mean_pool (bf16 one-hot matmul, f32 1/count scaling)
    # + graph_pred_linear head.  Output block is lane-dense (t_pad = 128).
    @pl.when(l == num_layer - 1)
    def _():
        pooled = jnp.dot(p_ref[...], h_sc[...],
                         preferred_element_type=jnp.float32) * inv_ref[...]
        out_ref[...] = jnp.dot(pooled, wp_ref[...],
                               preferred_element_type=jnp.float32) + bp_ref[...]


def fused_gnn_pallas(A, EAGG, W1, B1, W2, B2, GAM, BET, H0, P, INV, WP, BP,
                     *, n_valid, num_layer):
    n_pad, d_pad = H0.shape
    h_pad = W1.shape[2]
    g_pad = P.shape[0]
    t_pad = WP.shape[1]

    kernel = partial(fused_gnn_kernel, n_valid=n_valid, num_layer=num_layer)

    # --- per-generation VMEM budget (item: do not hard-code 32 MiB) -------
    vmem_cap = 64 * 1024 * 1024            # conservative default (v7x)
    try:
        vmem_cap = int(pltpu.get_tpu_info().vmem_capacity_bytes)
    except Exception:
        pass
    scratch_bytes = n_pad * n_pad * 2 + n_pad * d_pad * 2          # a_sc + h_sc
    const_bytes = 2 * (H0.size * 2 + P.size * 2 + INV.size * 4
                       + WP.size * 4 + BP.size * 4 + g_pad * t_pad * 4)
    layer_bytes = 2 * (n_pad * d_pad * 4 + d_pad * h_pad * 2 + h_pad * 4
                       + h_pad * d_pad * 2 + 3 * d_pad * 4)        # dbl-buffered
    interm_bytes = 4 * n_pad * h_pad * 4                           # f32 temporaries
    want = scratch_bytes + const_bytes + layer_bytes + interm_bytes + (8 << 20)
    vmem_limit = max(16 << 20, min(int(want), vmem_cap * 3 // 4))
    if scratch_bytes > vmem_cap * 3 // 4:
        # TODO(synk): K-streaming / block-sparse fallback for very large batches.
        raise NotImplementedError(
            "adjacency too large for the VMEM-resident path on this TPU")

    flops = int(num_layer * (2 * n_pad * n_pad * d_pad          # A @ h
                             + 2 * n_pad * d_pad * h_pad        # MLP 1
                             + 2 * n_pad * h_pad * d_pad)       # MLP 2
                + 2 * g_pad * n_pad * d_pad + 2 * g_pad * d_pad * t_pad)
    bytes_accessed = int(A.size * 2                              # A read ONCE
                         + EAGG.size * 4 + W1.size * 2 + W2.size * 2
                         + (B1.size + B2.size + GAM.size + BET.size) * 4
                         + H0.size * 2 + P.size * 2 + INV.size * 4
                         + WP.size * 4 + BP.size * 4 + g_pad * t_pad * 4)

    grid_spec = pltpu.PrefetchScalarGridSpec(
        num_scalar_prefetch=0,
        grid=(num_layer,),
        in_specs=[
            pl.BlockSpec(memory_space=pl.ANY),                        # A (HBM)
            pl.BlockSpec((None, n_pad, d_pad), lambda l: (l, 0, 0)),  # EAGG
            pl.BlockSpec((None, d_pad, h_pad), lambda l: (l, 0, 0)),  # w1
            pl.BlockSpec((None, 1, h_pad), lambda l: (l, 0, 0)),      # b1
            pl.BlockSpec((None, h_pad, d_pad), lambda l: (l, 0, 0)),  # w2
            pl.BlockSpec((None, 1, d_pad), lambda l: (l, 0, 0)),      # b2
            pl.BlockSpec((None, 1, d_pad), lambda l: (l, 0, 0)),      # gamma
            pl.BlockSpec((None, 1, d_pad), lambda l: (l, 0, 0)),      # beta
            pl.BlockSpec((n_pad, d_pad), lambda l: (0, 0)),           # h0 (bf16)
            pl.BlockSpec((g_pad, n_pad), lambda l: (0, 0)),           # pool 1-hot
            pl.BlockSpec((g_pad, 1), lambda l: (0, 0)),               # 1/|graph|
            pl.BlockSpec((d_pad, t_pad), lambda l: (0, 0)),           # wp
            pl.BlockSpec((1, t_pad), lambda l: (0, 0)),               # bp
        ],
        out_specs=pl.BlockSpec((g_pad, t_pad), lambda l: (0, 0)),
        scratch_shapes=[
            pltpu.VMEM((n_pad, n_pad), jnp.bfloat16),   # resident adjacency
            pltpu.VMEM((n_pad, d_pad), jnp.bfloat16),   # resident node features
            pltpu.SemaphoreType.DMA,                    # adjacency-load DMA sem
        ],
    )

    return pl.pallas_call(
        kernel,
        out_shape=jax.ShapeDtypeStruct((g_pad, t_pad), jnp.float32),
        grid_spec=grid_spec,
        compiler_params=pltpu.CompilerParams(
            dimension_semantics=("arbitrary",),
            vmem_limit_bytes=vmem_limit),
        cost_estimate=pl.CostEstimate(flops=flops,
                                      transcendentals=int(num_layer * d_pad),
                                      bytes_accessed=bytes_accessed),
    )(A, EAGG, W1, B1, W2, B2, GAM, BET, H0, P, INV, WP, BP)


# ---------------------------------------------------------------------------
# Parameters (mirror the torch module's init) and the forward wrapper
# ---------------------------------------------------------------------------

def _xavier(key, shape):
    fan_in, fan_out = shape
    bound = (6.0 / (fan_in + fan_out)) ** 0.5
    return jax.random.uniform(key, shape, jnp.float32, -bound, bound)


def init_params(key, num_layer, emb_dim, num_tasks):
    ks = jax.random.split(key, 3 + 4 * num_layer)
    params = {
        "x_emb1": _xavier(ks[0], (NUM_ATOM_TYPE, emb_dim)),
        "x_emb2": _xavier(ks[1], (NUM_CHIRALITY_TAG, emb_dim)),
        "wp": _xavier(ks[2], (emb_dim, num_tasks)),
        "bp": jnp.zeros((num_tasks,), jnp.float32),
        "layers": [],
    }
    for l in range(num_layer):
        k0, k1, k2, k3 = ks[3 + 4 * l: 7 + 4 * l]
        params["layers"].append({
            "w1": _xavier(k0, (emb_dim, 2 * emb_dim)),
            "b1": jnp.zeros((2 * emb_dim,), jnp.float32),
            "w2": _xavier(k1, (2 * emb_dim, emb_dim)),
            "b2": jnp.zeros((emb_dim,), jnp.float32),
            "edge_emb1": _xavier(k2, (NUM_BOND_TYPE, emb_dim)),
            "edge_emb2": _xavier(k3, (NUM_BOND_DIRECTION, emb_dim)),
            "gamma": jnp.ones((emb_dim,), jnp.float32),
            "beta": jnp.zeros((emb_dim,), jnp.float32),
        })
    return params


def gnn_graphpred_forward(params, x, edge_index, edge_attr, batch, num_graphs):
    N = x.shape[0]
    D = params["x_emb1"].shape[1]
    T = params["wp"].shape[1]
    L = len(params["layers"])

    n_pad = _round_up(N, LANE)
    d_pad = _round_up(D, LANE)
    h_pad = _round_up(2 * D, LANE)
    t_pad = _round_up(T, LANE)
    g_pad = _round_up(num_graphs, 8)

    # node input embeddings (gather glue), padded lane-dense, bf16 (read once)
    h0 = params["x_emb1"][x[:, 0]] + params["x_emb2"][x[:, 1]]
    H0 = _pad2d(h0, n_pad, d_pad).astype(jnp.bfloat16)

    # add self loops (self-loop edge_attr = [4, 0])
    self_idx = jnp.arange(N, dtype=edge_index.dtype)
    ei = jnp.concatenate([edge_index, jnp.stack([self_idx, self_idx])], axis=1)
    self_attr = jnp.concatenate(
        [jnp.full((N, 1), 4, edge_attr.dtype), jnp.zeros((N, 1), edge_attr.dtype)],
        axis=1)
    ea = jnp.concatenate([edge_attr, self_attr], axis=0)
    src, dst = ei[0], ei[1]

    # dense adjacency count matrix (dst x src) built directly in bf16 (counts
    # are small exact integers; no N^2 f32 intermediate in the XLA glue)
    A = jnp.zeros((n_pad, n_pad), jnp.bfloat16).at[dst, src].add(
        jnp.ones(dst.shape, jnp.bfloat16))

    # per-destination (bond_type, dir) counts; the per-layer edge-embedding
    # aggregation EAGG[l] = EC @ table_l is a tiny matmul done here in XLA.
    e_idx = ea[:, 0] * NUM_BOND_DIRECTION + ea[:, 1]
    EC = jnp.zeros((n_pad, NUM_BOND_TYPE * NUM_BOND_DIRECTION), jnp.float32
                   ).at[dst, e_idx].add(1.0).astype(jnp.bfloat16)
    tables = jnp.stack([
        (lp["edge_emb1"][:, None, :] + lp["edge_emb2"][None, :, :]
         ).reshape(NUM_BOND_TYPE * NUM_BOND_DIRECTION, D)
        for lp in params["layers"]], axis=0).astype(jnp.bfloat16)
    eagg = jnp.einsum("ne,led->lnd", EC, tables,
                      preferred_element_type=jnp.float32)
    EAGG = jnp.zeros((L, n_pad, d_pad), jnp.float32).at[:, :, :D].set(eagg)

    # stacked per-layer params, padded lane-dense
    def stack(fn):
        return jnp.stack([fn(lp) for lp in params["layers"]], axis=0)

    W1 = stack(lambda lp: _pad2d(lp["w1"], d_pad, h_pad)).astype(jnp.bfloat16)
    B1 = stack(lambda lp: _pad2d(lp["b1"][None, :], 1, h_pad))
    W2 = stack(lambda lp: _pad2d(lp["w2"], h_pad, d_pad)).astype(jnp.bfloat16)
    B2 = stack(lambda lp: _pad2d(lp["b2"][None, :], 1, d_pad))
    GAM = stack(lambda lp: _pad2d(lp["gamma"][None, :], 1, d_pad))
    BET = stack(lambda lp: _pad2d(lp["beta"][None, :], 1, d_pad))

    # mean-pool: bf16 unnormalised one-hot + f32 inverse counts
    onehot = (batch[None, :] == jnp.arange(num_graphs)[:, None]).astype(jnp.float32)
    cnt = jnp.maximum(onehot.sum(axis=1, keepdims=True), 1.0)
    P = _pad2d(onehot, g_pad, n_pad).astype(jnp.bfloat16)
    INV = _pad2d(1.0 / cnt, g_pad, 1)

    WP = _pad2d(params["wp"], d_pad, t_pad)
    BP = _pad2d(params["bp"][None, :], 1, t_pad)

    out = fused_gnn_pallas(A, EAGG, W1, B1, W2, B2, GAM, BET, H0, P, INV, WP, BP,
                           n_valid=N, num_layer=L)
    return out[:num_graphs, :T]


# ---------------------------------------------------------------------------
# Pure-JAX reference (mirrors the kernel's bf16-in / f32-accumulate arithmetic)
# ---------------------------------------------------------------------------

def reference_forward(params, x, edge_index, edge_attr, batch, num_graphs):
    N = x.shape[0]
    D = params["x_emb1"].shape[1]
    h = params["x_emb1"][x[:, 0]] + params["x_emb2"][x[:, 1]]

    self_idx = jnp.arange(N, dtype=edge_index.dtype)
    ei = jnp.concatenate([edge_index, jnp.stack([self_idx, self_idx])], axis=1)
    self_attr = jnp.concatenate(
        [jnp.full((N, 1), 4, edge_attr.dtype), jnp.zeros((N, 1), edge_attr.dtype)],
        axis=1)
    ea = jnp.concatenate([edge_attr, self_attr], axis=0)
    src, dst = ei[0], ei[1]

    A = jnp.zeros((N, N), jnp.float32).at[dst, src].add(1.0).astype(jnp.bfloat16)
    e_idx = ea[:, 0] * NUM_BOND_DIRECTION + ea[:, 1]
    EC = jnp.zeros((N, NUM_BOND_TYPE * NUM_BOND_DIRECTION), jnp.float32
                   ).at[dst, e_idx].add(1.0).astype(jnp.bfloat16)

    L = len(params["layers"])
    for l, lp in enumerate(params["layers"]):
        table = (lp["edge_emb1"][:, None, :] + lp["edge_emb2"][None, :, :]
                 ).reshape(-1, D).astype(jnp.bfloat16)
        eagg = jnp.dot(EC, table, preferred_element_type=jnp.float32)
        aggr = eagg + jnp.dot(A, h.astype(jnp.bfloat16),
                              preferred_element_type=jnp.float32)
        t = jnp.dot(aggr.astype(jnp.bfloat16), lp["w1"].astype(jnp.bfloat16),
                    preferred_element_type=jnp.float32) + lp["b1"]
        t = jnp.maximum(t, 0.0)
        h2 = jnp.dot(t.astype(jnp.bfloat16), lp["w2"].astype(jnp.bfloat16),
                     preferred_element_type=jnp.float32) + lp["b2"]
        mean = jnp.mean(h2, axis=0, keepdims=True)
        var = jnp.mean((h2 - mean) ** 2, axis=0, keepdims=True)
        h = (h2 - mean) * jax.lax.rsqrt(var + BN_EPS) * lp["gamma"] + lp["beta"]
        if l != L - 1:
            h = jnp.maximum(h, 0.0)

    onehot = (batch[None, :] == jnp.arange(num_graphs)[:, None]).astype(jnp.float32)
    cnt = jnp.maximum(onehot.sum(axis=1, keepdims=True), 1.0)
    pooled = jnp.dot(onehot.astype(jnp.bfloat16), h.astype(jnp.bfloat16),
                     preferred_element_type=jnp.float32) / cnt
    return jnp.dot(pooled, params["wp"]) + params["bp"][None, :]


# ---------------------------------------------------------------------------

if __name__ == "__main__":
    NUM_LAYER = 3
    EMB_DIM = 32
    NUM_TASKS = 3
    N_GRAPHS = 4
    NODES_PER_GRAPH = 50
    EDGES_PER_GRAPH = 100
    N_NODES = N_GRAPHS * NODES_PER_GRAPH        # 200 -> padded to 256

    key = jax.random.PRNGKey(0)
    k_param, k_x0, k_x1, k_e, k_ea0, k_ea1 = jax.random.split(key, 6)

    params = init_params(k_param, NUM_LAYER, EMB_DIM, NUM_TASKS)

    # node features: [atom_type, chirality_tag]
    x = jnp.stack([
        jax.random.randint(k_x0, (N_NODES,), 0, NUM_ATOM_TYPE),
        jax.random.randint(k_x1, (N_NODES,), 0, NUM_CHIRALITY_TAG),
    ], axis=1).astype(jnp.int32)

    # random edges, each contained within one graph
    ekeys = jax.random.split(k_e, 2 * N_GRAPHS)
    srcs, dsts = [], []
    for g in range(N_GRAPHS):
        lo, hi = g * NODES_PER_GRAPH, (g + 1) * NODES_PER_GRAPH
        srcs.append(jax.random.randint(ekeys[2 * g], (EDGES_PER_GRAPH,), lo, hi))
        dsts.append(jax.random.randint(ekeys[2 * g + 1], (EDGES_PER_GRAPH,), lo, hi))
    edge_index = jnp.stack([jnp.concatenate(srcs),
                            jnp.concatenate(dsts)]).astype(jnp.int32)

    n_edges = edge_index.shape[1]
    edge_attr = jnp.stack([
        jax.random.randint(k_ea0, (n_edges,), 0, NUM_BOND_TYPE),
        jax.random.randint(k_ea1, (n_edges,), 0, NUM_BOND_DIRECTION),
    ], axis=1).astype(jnp.int32)

    batch = jnp.repeat(jnp.arange(N_GRAPHS, dtype=jnp.int32), NODES_PER_GRAPH)

    fwd = jax.jit(gnn_graphpred_forward, static_argnames=("num_graphs",))
    out = fwd(params, x, edge_index, edge_attr, batch, num_graphs=N_GRAPHS)
    out = jax.block_until_ready(out)
    assert out.shape == (N_GRAPHS, NUM_TASKS)
    assert bool(jnp.all(jnp.isfinite(out))), "non-finite output"

    ref = jax.block_until_ready(
        reference_forward(params, x, edge_index, edge_attr, batch, N_GRAPHS))
    err = float(jnp.max(jnp.abs(out - ref)))
    assert err < 2e-2, f"mismatch vs reference: max abs err {err}"

    print("KERNEL_OK")
</pallas_src>

<mosaic_0001>
module attributes {stable_mosaic.version = 11 : i64} {
  func.func @fused_gnn_kernel(%arg0: i32, %arg1: memref<256x256xbf16, #tpu.memory_space<any>>, %arg2: memref<1x256x128xf32, #tpu.memory_space<vmem>>, %arg3: memref<1x128x128xbf16, #tpu.memory_space<vmem>>, %arg4: memref<1x1x128xf32, #tpu.memory_space<vmem>>, %arg5: memref<1x128x128xbf16, #tpu.memory_space<vmem>>, %arg6: memref<1x1x128xf32, #tpu.memory_space<vmem>>, %arg7: memref<1x1x128xf32, #tpu.memory_space<vmem>>, %arg8: memref<1x1x128xf32, #tpu.memory_space<vmem>>, %arg9: memref<256x128xbf16, #tpu.memory_space<vmem>>, %arg10: memref<8x256xbf16, #tpu.memory_space<vmem>>, %arg11: memref<8x1xf32, #tpu.memory_space<vmem>>, %arg12: memref<128x128xf32, #tpu.memory_space<vmem>>, %arg13: memref<1x128xf32, #tpu.memory_space<vmem>>, %arg14: memref<8x128xf32, #tpu.memory_space<vmem>>, %arg15: memref<256x256xbf16, #tpu.memory_space<vmem>>, %arg16: memref<256x128xbf16, #tpu.memory_space<vmem>>, %arg17: memref<!tpu.dma_semaphore, #tpu.memory_space<semaphore_mem>>) attributes {dimension_semantics = [#tpu.dimension_semantics<arbitrary>], iteration_bounds = array<i64: 3>, scalar_prefetch = 0 : i64, scratch_operands = 3 : i64, tpu.core_type = #tpu.core_type<tc>, window_params = [{}, {transform_indices = @transform_1, window_bounds = array<i64: 1, 256, 128>}, {transform_indices = @transform_2, window_bounds = array<i64: 1, 128, 128>}, {transform_indices = @transform_3, window_bounds = array<i64: 1, 1, 128>}, {transform_indices = @transform_4, window_bounds = array<i64: 1, 128, 128>}, {transform_indices = @transform_5, window_bounds = array<i64: 1, 1, 128>}, {transform_indices = @transform_6, window_bounds = array<i64: 1, 1, 128>}, {transform_indices = @transform_7, window_bounds = array<i64: 1, 1, 128>}, {pipeline_mode = #tpu.pipeline_mode<synchronous>, transform_indices = @transform_8, window_bounds = array<i64: 256, 128>}, {pipeline_mode = #tpu.pipeline_mode<synchronous>, transform_indices = @transform_9, window_bounds = array<i64: 8, 256>}, {pipeline_mode = #tpu.pipeline_mode<synchronous>, transform_indices = @transform_10, window_bounds = array<i64: 8, 1>}, {pipeline_mode = #tpu.pipeline_mode<synchronous>, transform_indices = @transform_11, window_bounds = array<i64: 128, 128>}, {pipeline_mode = #tpu.pipeline_mode<synchronous>, transform_indices = @transform_12, window_bounds = array<i64: 1, 128>}, {pipeline_mode = #tpu.pipeline_mode<synchronous>, transform_indices = @transform_13, window_bounds = array<i64: 8, 128>}]} {
    %c0_i32 = arith.constant 0 : i32
    %0 = arith.cmpi eq, %arg0, %c0_i32 : i32
    %1 = arith.extui %0 : i1 to i32
    %c0_i32_0 = arith.constant 0 : i32
    %2 = arith.cmpi ne, %1, %c0_i32_0 : i32
    scf.if %2 {
      tpu.enqueue_dma source(%arg1 : memref<256x256xbf16, #tpu.memory_space<any>>) target(%arg15 : memref<256x256xbf16, #tpu.memory_space<vmem>>) target_semaphore(%arg17 : memref<!tpu.dma_semaphore, #tpu.memory_space<semaphore_mem>>)
      %c0_38 = arith.constant 0 : index
      %c0_39 = arith.constant 0 : index
      %73 = vector.load %arg9[%c0_38, %c0_39] : memref<256x128xbf16, #tpu.memory_space<vmem>>, vector<256x128xbf16>
      %c0_40 = arith.constant 0 : index
      %c0_41 = arith.constant 0 : index
      %74 = vector.load %arg16[%c0_40, %c0_41] : memref<256x128xbf16, #tpu.memory_space<vmem>>, vector<256x128xbf16>
      tpu.vector_store %arg16[%c0_40, %c0_41], %73 {strides = array<i32>} : memref<256x128xbf16, #tpu.memory_space<vmem>>, vector<256x128xbf16>,
      tpu.wait_dma2 semaphore(%arg17 : memref<!tpu.dma_semaphore, #tpu.memory_space<semaphore_mem>>) src(%arg1 : memref<256x256xbf16, #tpu.memory_space<any>>) dst(%arg15 : memref<256x256xbf16, #tpu.memory_space<vmem>>)
    } else {
    }
    %c0 = arith.constant 0 : index
    %c0_1 = arith.constant 0 : index
    %c0_2 = arith.constant 0 : index
    %3 = vector.load %arg2[%c0, %c0_1, %c0_2] : memref<1x256x128xf32, #tpu.memory_space<vmem>>, vector<1x256x128xf32>
    %4 = vector.shape_cast %3 : vector<1x256x128xf32> to vector<256x128xf32>
    %c0_3 = arith.constant 0 : index
    %c0_4 = arith.constant 0 : index
    %5 = vector.load %arg15[%c0_3, %c0_4] : memref<256x256xbf16, #tpu.memory_space<vmem>>, vector<256x256xbf16>
    %c0_5 = arith.constant 0 : index
    %c0_6 = arith.constant 0 : index
    %6 = vector.load %arg16[%c0_5, %c0_6] : memref<256x128xbf16, #tpu.memory_space<vmem>>, vector<256x128xbf16>
    %cst = arith.constant dense<0.000000e+00> : vector<256x128xf32>
    %7 = tpu.matmul %5, %6, %cst {dimension_numbers = #tpu.dot_dimension_numbers<[1], [0], [0], [1], [0, 0, 1, 1], [], []>} : vector<256x256xbf16>, vector<256x128xbf16>, vector<256x128xf32> -> vector<256x128xf32>
    %8 = arith.addf %4, %7 : vector<256x128xf32>
    %9 = arith.truncf %8 : vector<256x128xf32> to vector<256x128xbf16>
    %c0_7 = arith.constant 0 : index
    %c0_8 = arith.constant 0 : index
    %c0_9 = arith.constant 0 : index
    %10 = vector.load %arg3[%c0_7, %c0_8, %c0_9] : memref<1x128x128xbf16, #tpu.memory_space<vmem>>, vector<1x128x128xbf16>
    %11 = vector.shape_cast %10 : vector<1x128x128xbf16> to vector<128x128xbf16>
    %cst_10 = arith.constant dense<0.000000e+00> : vector<256x128xf32>
    %12 = tpu.matmul %9, %11, %cst_10 {dimension_numbers = #tpu.dot_dimension_numbers<[1], [0], [0], [1], [0, 0, 1, 1], [], []>} : vector<256x128xbf16>, vector<128x128xbf16>, vector<256x128xf32> -> vector<256x128xf32>
    %c0_11 = arith.constant 0 : index
    %c0_12 = arith.constant 0 : index
    %c0_13 = arith.constant 0 : index
    %13 = vector.load %arg4[%c0_11, %c0_12, %c0_13] : memref<1x1x128xf32, #tpu.memory_space<vmem>>, vector<1x1x128xf32>
    %14 = vector.shape_cast %13 : vector<1x1x128xf32> to vector<1x128xf32>
    %15 = vector.broadcast %14 : vector<1x128xf32> to vector<256x128xf32>
    %16 = arith.addf %12, %15 : vector<256x128xf32>
    %cst_14 = arith.constant 0.000000e+00 : f32
    %17 = vector.broadcast %cst_14 : f32 to vector<256x128xf32>
    %18 = arith.maximumf %16, %17 : vector<256x128xf32>
    %19 = arith.truncf %18 : vector<256x128xf32> to vector<256x128xbf16>
    %c0_15 = arith.constant 0 : index
    %c0_16 = arith.constant 0 : index
    %c0_17 = arith.constant 0 : index
    %20 = vector.load %arg5[%c0_15, %c0_16, %c0_17] : memref<1x128x128xbf16, #tpu.memory_space<vmem>>, vector<1x128x128xbf16>
    %21 = vector.shape_cast %20 : vector<1x128x128xbf16> to vector<128x128xbf16>
    %cst_18 = arith.constant dense<0.000000e+00> : vector<256x128xf32>
    %22 = tpu.matmul %19, %21, %cst_18 {dimension_numbers = #tpu.dot_dimension_numbers<[1], [0], [0], [1], [0, 0, 1, 1], [], []>} : vector<256x128xbf16>, vector<128x128xbf16>, vector<256x128xf32> -> vector<256x128xf32>
    %c0_19 = arith.constant 0 : index
    %c0_20 = arith.constant 0 : index
    %c0_21 = arith.constant 0 : index
    %23 = vector.load %arg6[%c0_19, %c0_20, %c0_21] : memref<1x1x128xf32, #tpu.memory_space<vmem>>, vector<1x1x128xf32>
    %24 = vector.shape_cast %23 : vector<1x1x128xf32> to vector<1x128xf32>
    %25 = vector.broadcast %24 : vector<1x128xf32> to vector<256x128xf32>
    %26 = arith.addf %22, %25 : vector<256x128xf32>
    %27 = tpu.iota {dimensions = array<i32: 0>} : vector<256x1xi32>
    %c200_i32 = arith.constant 200 : i32
    %28 = vector.broadcast %c200_i32 : i32 to vector<256x1xi32>
    %29 = arith.cmpi slt, %27, %28 : vector<256x1xi32>
    %30 = arith.extui %29 : vector<256x1xi1> to vector<256x1xi32>
    %31 = arith.sitofp %30 : vector<256x1xi32> to vector<256x1xf32>
    %32 = vector.broadcast %31 : vector<256x1xf32> to vector<256x128xf32>
    %33 = arith.mulf %26, %32 : vector<256x128xf32>
    %cst_22 = arith.constant dense<0.000000e+00> : vector<128xf32>
    %34 = vector.multi_reduction <add>, %33, %cst_22 [0] : vector<256x128xf32> to vector<128xf32>
    %35 = vector.shape_cast %34 : vector<128xf32> to vector<1x128xf32>
    %cst_23 = arith.constant 5.000000e-03 : f32
    %36 = vector.broadcast %cst_23 : f32 to vector<1x128xf32>
    %37 = arith.mulf %35, %36 : vector<1x128xf32>
    %38 = vector.broadcast %37 : vector<1x128xf32> to vector<256x128xf32>
    %39 = arith.subf %26, %38 : vector<256x128xf32>
    %40 = arith.mulf %39, %39 : vector<256x128xf32>
    %41 = vector.broadcast %31 : vector<256x1xf32> to vector<256x128xf32>
    %42 = arith.mulf %40, %41 : vector<256x128xf32>
    %cst_24 = arith.constant dense<0.000000e+00> : vector<128xf32>
    %43 = vector.multi_reduction <add>, %42, %cst_24 [0] : vector<256x128xf32> to vector<128xf32>
    %44 = vector.shape_cast %43 : vector<128xf32> to vector<1x128xf32>
    %cst_25 = arith.constant 5.000000e-03 : f32
    %45 = vector.broadcast %cst_25 : f32 to vector<1x128xf32>
    %46 = arith.mulf %44, %45 : vector<1x128xf32>
    %47 = vector.broadcast %37 : vector<1x128xf32> to vector<256x128xf32>
    %48 = arith.subf %26, %47 : vector<256x128xf32>
    %cst_26 = arith.constant 9.99999974E-6 : f32
    %49 = vector.broadcast %cst_26 : f32 to vector<1x128xf32>
    %50 = arith.addf %46, %49 : vector<1x128xf32>
    %51 = math.rsqrt %50 : vector<1x128xf32>
    %52 = vector.broadcast %51 : vector<1x128xf32> to vector<256x128xf32>
    %53 = arith.mulf %48, %52 : vector<256x128xf32>
    %c0_27 = arith.constant 0 : index
    %c0_28 = arith.constant 0 : index
    %c0_29 = arith.constant 0 : index
    %54 = vector.load %arg7[%c0_27, %c0_28, %c0_29] : memref<1x1x128xf32, #tpu.memory_space<vmem>>, vector<1x1x128xf32>
    %55 = vector.shape_cast %54 : vector<1x1x128xf32> to vector<1x128xf32>
    %56 = vector.broadcast %55 : vector<1x128xf32> to vector<256x128xf32>
    %57 = arith.mulf %53, %56 : vector<256x128xf32>
    %c0_30 = arith.constant 0 : index
    %c0_31 = arith.constant 0 : index
    %c0_32 = arith.constant 0 : index
    %58 = vector.load %arg8[%c0_30, %c0_31, %c0_32] : memref<1x1x128xf32, #tpu.memory_space<vmem>>, vector<1x1x128xf32>
    %59 = vector.shape_cast %58 : vector<1x1x128xf32> to vector<1x128xf32>
    %60 = vector.broadcast %59 : vector<1x128xf32> to vector<256x128xf32>
    %61 = arith.addf %57, %60 : vector<256x128xf32>
    %c2_i32 = arith.constant 2 : i32
    %62 = arith.cmpi eq, %arg0, %c2_i32 : i32
    %cst_33 = arith.constant 0.000000e+00 : f32
    %63 = vector.broadcast %cst_33 : f32 to vector<256x128xf32>
    %64 = arith.maximumf %61, %63 : vector<256x128xf32>
    %65 = arith.select %62, %61, %64 : vector<256x128xf32>
    %66 = vector.broadcast %31 : vector<256x1xf32> to vector<256x128xf32>
    %67 = arith.mulf %65, %66 : vector<256x128xf32>
    %68 = arith.truncf %67 : vector<256x128xf32> to vector<256x128xbf16>
    %c0_34 = arith.constant 0 : index
    %c0_35 = arith.constant 0 : index
    %69 = vector.load %arg16[%c0_34, %c0_35] : memref<256x128xbf16, #tpu.memory_space<vmem>>, vector<256x128xbf16>
    tpu.vector_store %arg16[%c0_34, %c0_35], %68 {strides = array<i32>} : memref<256x128xbf16, #tpu.memory_space<vmem>>, vector<256x128xbf16>,
    %c2_i32_36 = arith.constant 2 : i32
    %70 = arith.cmpi eq, %arg0, %c2_i32_36 : i32
    %71 = arith.extui %70 : i1 to i32
    %c0_i32_37 = arith.constant 0 : i32
    %72 = arith.cmpi ne, %71, %c0_i32_37 : i32
    scf.if %72 {
      %c0_38 = arith.constant 0 : index
      %c0_39 = arith.constant 0 : index
      %73 = vector.load %arg10[%c0_38, %c0_39] : memref<8x256xbf16, #tpu.memory_space<vmem>>, vector<8x256xbf16>
      %c0_40 = arith.constant 0 : index
      %c0_41 = arith.constant 0 : index
      %74 = vector.load %arg16[%c0_40, %c0_41] : memref<256x128xbf16, #tpu.memory_space<vmem>>, vector<256x128xbf16>
      %cst_42 = arith.constant dense<0.000000e+00> : vector<8x128xf32>
      %75 = tpu.matmul %73, %74, %cst_42 {dimension_numbers = #tpu.dot_dimension_numbers<[1], [0], [0], [1], [0, 0, 1, 1], [], []>} : vector<8x256xbf16>, vector<256x128xbf16>, vector<8x128xf32> -> vector<8x128xf32>
      %c0_43 = arith.constant 0 : index
      %c0_44 = arith.constant 0 : index
      %76 = vector.load %arg11[%c0_43, %c0_44] : memref<8x1xf32, #tpu.memory_space<vmem>>, vector<8x1xf32>
      %77 = vector.broadcast %76 : vector<8x1xf32> to vector<8x128xf32>
      %78 = arith.mulf %75, %77 : vector<8x128xf32>
      %c0_45 = arith.constant 0 : index
      %c0_46 = arith.constant 0 : index
      %79 = vector.load %arg12[%c0_45, %c0_46] : memref<128x128xf32, #tpu.memory_space<vmem>>, vector<128x128xf32>
      %cst_47 = arith.constant dense<0.000000e+00> : vector<8x128xf32>
      %80 = tpu.matmul %78, %79, %cst_47 {dimension_numbers = #tpu.dot_dimension_numbers<[1], [0], [0], [1], [0, 0, 1, 1], [], []>} : vector<8x128xf32>, vector<128x128xf32>, vector<8x128xf32> -> vector<8x128xf32>
      %c0_48 = arith.constant 0 : index
      %c0_49 = arith.constant 0 : index
      %81 = vector.load %arg13[%c0_48, %c0_49] : memref<1x128xf32, #tpu.memory_space<vmem>>, vector<1x128xf32>
      %82 = vector.broadcast %81 : vector<1x128xf32> to vector<8x128xf32>
      %83 = arith.addf %80, %82 : vector<8x128xf32>
      %c0_50 = arith.constant 0 : index
      %c0_51 = arith.constant 0 : index
      %84 = vector.load %arg14[%c0_50, %c0_51] : memref<8x128xf32, #tpu.memory_space<vmem>>, vector<8x128xf32>
      tpu.vector_store %arg14[%c0_50, %c0_51], %83 {strides = array<i32>} : memref<8x128xf32, #tpu.memory_space<vmem>>, vector<8x128xf32>,
    } else {
    }
    return
  }
  func.func @transform_1(%arg0: i32) -> (i32, i32, i32) {
    %c0_i32 = arith.constant 0 : i32
    %c0_i32_0 = arith.constant 0 : i32
    %c0_i32_1 = arith.constant 0 : i32
    return %arg0, %c0_i32, %c0_i32_0 : i32, i32, i32
  }
  func.func @transform_2(%arg0: i32) -> (i32, i32, i32) {
    %c0_i32 = arith.constant 0 : i32
    %c0_i32_0 = arith.constant 0 : i32
    %c0_i32_1 = arith.constant 0 : i32
    return %arg0, %c0_i32, %c0_i32_0 : i32, i32, i32
  }
  func.func @transform_3(%arg0: i32) -> (i32, i32, i32) {
    %c0_i32 = arith.constant 0 : i32
    %c0_i32_0 = arith.constant 0 : i32
    %c0_i32_1 = arith.constant 0 : i32
    return %arg0, %c0_i32, %c0_i32_0 : i32, i32, i32
  }
  func.func @transform_4(%arg0: i32) -> (i32, i32, i32) {
    %c0_i32 = arith.constant 0 : i32
    %c0_i32_0 = arith.constant 0 : i32
    %c0_i32_1 = arith.constant 0 : i32
    return %arg0, %c0_i32, %c0_i32_0 : i32, i32, i32
  }
  func.func @transform_5(%arg0: i32) -> (i32, i32, i32) {
    %c0_i32 = arith.constant 0 : i32
    %c0_i32_0 = arith.constant 0 : i32
    %c0_i32_1 = arith.constant 0 : i32
    return %arg0, %c0_i32, %c0_i32_0 : i32, i32, i32
  }
  func.func @transform_6(%arg0: i32) -> (i32, i32, i32) {
    %c0_i32 = arith.constant 0 : i32
    %c0_i32_0 = arith.constant 0 : i32
    %c0_i32_1 = arith.constant 0 : i32
    return %arg0, %c0_i32, %c0_i32_0 : i32, i32, i32
  }
  func.func @transform_7(%arg0: i32) -> (i32, i32, i32) {
    %c0_i32 = arith.constant 0 : i32
    %c0_i32_0 = arith.constant 0 : i32
    %c0_i32_1 = arith.constant 0 : i32
    return %arg0, %c0_i32, %c0_i32_0 : i32, i32, i32
  }
  func.func @transform_8(%arg0: i32) -> (i32, i32) {
    %c0_i32 = arith.constant 0 : i32
    %c0_i32_0 = arith.constant 0 : i32
    %c0_i32_1 = arith.constant 0 : i32
    return %c0_i32, %c0_i32_0 : i32, i32
  }
  func.func @transform_9(%arg0: i32) -> (i32, i32) {
    %c0_i32 = arith.constant 0 : i32
    %c0_i32_0 = arith.constant 0 : i32
    %c0_i32_1 = arith.constant 0 : i32
    return %c0_i32, %c0_i32_0 : i32, i32
  }
  func.func @transform_10(%arg0: i32) -> (i32, i32) {
    %c0_i32 = arith.constant 0 : i32
    %c0_i32_0 = arith.constant 0 : i32
    %c0_i32_1 = arith.constant 0 : i32
    return %c0_i32, %c0_i32_0 : i32, i32
  }
  func.func @transform_11(%arg0: i32) -> (i32, i32) {
    %c0_i32 = arith.constant 0 : i32
    %c0_i32_0 = arith.constant 0 : i32
    %c0_i32_1 = arith.constant 0 : i32
    return %c0_i32, %c0_i32_0 : i32, i32
  }
  func.func @transform_12(%arg0: i32) -> (i32, i32) {
    %c0_i32 = arith.constant 0 : i32
    %c0_i32_0 = arith.constant 0 : i32
    %c0_i32_1 = arith.constant 0 : i32
    return %c0_i32, %c0_i32_0 : i32, i32
  }
  func.func @transform_13(%arg0: i32) -> (i32, i32) {
    %c0_i32 = arith.constant 0 : i32
    %c0_i32_0 = arith.constant 0 : i32
    %c0_i32_1 = arith.constant 0 : i32
    return %c0_i32, %c0_i32_0 : i32, i32
  }
}

</mosaic_0001>

<llo_original>
// kernel: gnn_graphpred_forward.1
$region0: #{gnn_graphpred_forward.1}
  #allocation0 [shape = 'u32[]', space=smem, size = 0x4, offset = 0x4, fixed_abs, tag = 'smem constant byte address 0x4 - core index']
  #allocation1 [shape = 'u32[144,128]{1,0:T(1,128)}', space=vmem, size = 0x12000, scoped, tag = 'internal scratch']
  #allocation2 [shape = 'bf16[256,256]{1,0:T(16,128)(2,1)}', space=vmem, size = 0x20000, scoped, tag = 'scratch operand']
  #allocation3 [shape = 'bf16[256,128]{1,0:T(16,128)(2,1)}', space=vmem, size = 0x10000, scoped, tag = 'scratch operand']
  #allocation4 [shape = 's32[1]{0}', space=sflag, size = 0x4, scoped, tag = 'scratch operand']
  #allocation5 [shape = 's32[]', space=sflag, size = 0x4, offset = 0, fixed_abs, tag = 'sflag constant byte address 0x0 - dummy sync flag']
  %s0 = inlined_call_operand.vmem [shape: bf16[256,256], index: 0, kind: input, shape index: {}]
  %s1 = inlined_call_operand.vmem [shape: f32[3,256,128], index: 1, kind: input, shape index: {}]
  %s2 = inlined_call_operand.vmem [shape: bf16[3,128,128], index: 2, kind: input, shape index: {}]
  %s3 = inlined_call_operand.vmem [shape: f32[3,1,128], index: 3, kind: input, shape index: {}]
  %s4 = inlined_call_operand.vmem [shape: bf16[3,128,128], index: 4, kind: input, shape index: {}]
  %s5 = inlined_call_operand.vmem [shape: f32[3,1,128], index: 5, kind: input, shape index: {}]
  %s6 = inlined_call_operand.vmem [shape: f32[3,1,128], index: 6, kind: input, shape index: {}]
  %s7 = inlined_call_operand.vmem [shape: f32[3,1,128], index: 7, kind: input, shape index: {}]
  %s8 = inlined_call_operand.vmem [shape: bf16[256,128], index: 8, kind: input, shape index: {}]
  %s9 = inlined_call_operand.vmem [shape: bf16[8,256], index: 9, kind: input, shape index: {}]
  %s10 = inlined_call_operand.vmem [shape: f32[8,1], index: 10, kind: input, shape index: {}]
  %s11 = inlined_call_operand.vmem [shape: f32[128,128], index: 11, kind: input, shape index: {}]
  %s12 = inlined_call_operand.vmem [shape: f32[1,128], index: 12, kind: input, shape index: {}]
  %s13 = inlined_call_operand.vmem [shape: f32[8,128], index: 13, kind: output, shape index: {}]
  %s14 = sld [smem:[#allocation0]]
  $region126: #{gnn_graphpred_forward.1} parent=0
    _
  %s16 = ssub.s32 1, %s14
  %s17 = scalar_select 0, %s16, %s14
  loop: start=0, step=1, limit=5
  $region2: #{gnn_graphpred_forward.1} parent=0 // loop_pre_header
    _
  $region3: #{gnn_graphpred_forward.1} parent=0 // loop_header
    %s19 = sphi 0, %s23
    %p20 = scmp.ge.s32.totalorder %s19, 5
    %s29 = sphi 0, %s31
    %s32 = sphi 0, %s29
    %s33 = sphi 0, %s32
    %s49 = sphi 0, %s33
    %s55 = sphi 0, %s57
    %s58 = sphi 0, %s55
    %s59 = sphi 0, %s58
    %s75 = sphi 0, %s59
    %s81 = sphi 0, %s83
    %s84 = sphi 0, %s81
    %s85 = sphi 0, %s84
    %s101 = sphi 0, %s85
    %s107 = sphi 0, %s109
    %s110 = sphi 0, %s107
    %s111 = sphi 0, %s110
    %s127 = sphi 0, %s111
    %s133 = sphi 0, %s135
    %s136 = sphi 0, %s133
    %s137 = sphi 0, %s136
    %s153 = sphi 0, %s137
    %s159 = sphi 0, %s161
    %s162 = sphi 0, %s159
    %s163 = sphi 0, %s162
    %s179 = sphi 0, %s163
    %s185 = sphi 0, %s187
    %s188 = sphi 0, %s185
    %s189 = sphi 0, %s188
    %s205 = sphi 0, %s189
    %s209 = sphi 0, %s209
    %s211 = sphi 0, %s209
    %s212 = sphi 0, %s211
    %s226 = sphi 0, %s212
    %s230 = sphi 0, %s230
    %s232 = sphi 0, %s230
    %s233 = sphi 0, %s232
    %s247 = sphi 0, %s233
    %s251 = sphi 0, %s251
    %s253 = sphi 0, %s251
    %s254 = sphi 0, %s253
    %s268 = sphi 0, %s254
    %s272 = sphi 0, %s272
    %s274 = sphi 0, %s272
    %s275 = sphi 0, %s274
    %s289 = sphi 0, %s275
    %s293 = sphi 0, %s293
    %s295 = sphi 0, %s293
    %s296 = sphi 0, %s295
    %s310 = sphi 0, %s296
    %s314 = sphi 0, %s314
    %s316 = sphi 0, %s314
    %s317 = sphi 0, %s316
    %s331 = sphi 0, %s317
  $region4: #{gnn_graphpred_forward.1} parent=0 // loop_header_branch
    %22 = sbr.rel (%p20) target = $region8
  $region5: #{gnn_graphpred_forward.1} parent=0 // loop_body
    %s24 = ssub.s32 %s19, 1
    %s25 = ssub.s32 %s19, 2
    %s26 = sadd.s32 %s19, 1
    %s27 = ssub.s32 %s19, %s26
    %p28 = scmp.eq.s32.totalorder %s27, 0
    %s30 = sadd.s32 %s29, 1
    %s31 = scalar_select %p28, %s29, %s30
    %p34 = pneg %p28
    %p35 = scmp.eq.s32.totalorder %s19, 2
    %p36 = por %p34, %p35
    %p37 = scmp.ne.s32.totalorder %s29, %s32
    %p38 = scmp.eq.s32.totalorder %s19, 0
    %p39 = por %p37, %p38
    %p40 = scmp.ne.s32.totalorder %s29, %s32
    %p41 = scmp.eq.s32.totalorder %s24, 2
    %p42 = por %p40, %p41
    %p43 = scmp.ne.s32.totalorder %s32, %s33
    %p44 = scmp.eq.s32.totalorder %s24, 0
    %p45 = por %p43, %p44
    %p46 = scmp.ne.s32.totalorder %s32, %s33
    %p47 = scmp.eq.s32.totalorder %s25, 2
    %p48 = por %p46, %p47
    %p50 = scmp.ne.s32.totalorder %s33, %s49
    %p51 = scmp.eq.s32.totalorder %s25, 0
    %p52 = por %p50, %p51
    %s53 = ssub.s32 %s19, %s26
    %p54 = scmp.eq.s32.totalorder %s53, 0
    %s56 = sadd.s32 %s55, 1
    %s57 = scalar_select %p54, %s55, %s56
    %p60 = pneg %p54
    %p61 = scmp.eq.s32.totalorder %s19, 2
    %p62 = por %p60, %p61
    %p63 = scmp.ne.s32.totalorder %s55, %s58
    %p64 = scmp.eq.s32.totalorder %s19, 0
    %p65 = por %p63, %p64
    %p66 = scmp.ne.s32.totalorder %s55, %s58
    %p67 = scmp.eq.s32.totalorder %s24, 2
    %p68 = por %p66, %p67
    %p69 = scmp.ne.s32.totalorder %s58, %s59
    %p70 = scmp.eq.s32.totalorder %s24, 0
    %p71 = por %p69, %p70
    %p72 = scmp.ne.s32.totalorder %s58, %s59
    %p73 = scmp.eq.s32.totalorder %s25, 2
    %p74 = por %p72, %p73
    %p76 = scmp.ne.s32.totalorder %s59, %s75
    %p77 = scmp.eq.s32.totalorder %s25, 0
    %p78 = por %p76, %p77
    %s79 = ssub.s32 %s19, %s26
    %p80 = scmp.eq.s32.totalorder %s79, 0
    %s82 = sadd.s32 %s81, 1
    %s83 = scalar_select %p80, %s81, %s82
    %p86 = pneg %p80
    %p87 = scmp.eq.s32.totalorder %s19, 2
    %p88 = por %p86, %p87
    %p89 = scmp.ne.s32.totalorder %s81, %s84
    %p90 = scmp.eq.s32.totalorder %s19, 0
    %p91 = por %p89, %p90
    %p92 = scmp.ne.s32.totalorder %s81, %s84
    %p93 = scmp.eq.s32.totalorder %s24, 2
    %p94 = por %p92, %p93
    %p95 = scmp.ne.s32.totalorder %s84, %s85
    %p96 = scmp.eq.s32.totalorder %s24, 0
    %p97 = por %p95, %p96
    %p98 = scmp.ne.s32.totalorder %s84, %s85
    %p99 = scmp.eq.s32.totalorder %s25, 2
    %p100 = por %p98, %p99
    %p102 = scmp.ne.s32.totalorder %s85, %s101
    %p103 = scmp.eq.s32.totalorder %s25, 0
    %p104 = por %p102, %p103
    %s105 = ssub.s32 %s19, %s26
    %p106 = scmp.eq.s32.totalorder %s105, 0
    %s108 = sadd.s32 %s107, 1
    %s109 = scalar_select %p106, %s107, %s108
    %p112 = pneg %p106
    %p113 = scmp.eq.s32.totalorder %s19, 2
    %p114 = por %p112, %p113
    %p115 = scmp.ne.s32.totalorder %s107, %s110
    %p116 = scmp.eq.s32.totalorder %s19, 0
    %p117 = por %p115, %p116
    %p118 = scmp.ne.s32.totalorder %s107, %s110
    %p119 = scmp.eq.s32.totalorder %s24, 2
    %p120 = por %p118, %p119
    %p121 = scmp.ne.s32.totalorder %s110, %s111
    %p122 = scmp.eq.s32.totalorder %s24, 0
    %p123 = por %p121, %p122
    %p124 = scmp.ne.s32.totalorder %s110, %s111
    %p125 = scmp.eq.s32.totalorder %s25, 2
    %p126 = por %p124, %p125
    %p128 = scmp.ne.s32.totalorder %s111, %s127
    %p129 = scmp.eq.s32.totalorder %s25, 0
    %p130 = por %p128, %p129
    %s131 = ssub.s32 %s19, %s26
    %p132 = scmp.eq.s32.totalorder %s131, 0
    %s134 = sadd.s32 %s133, 1
    %s135 = scalar_select %p132, %s133, %s134
    %p138 = pneg %p132
    %p139 = scmp.eq.s32.totalorder %s19, 2
    %p140 = por %p138, %p139
    %p141 = scmp.ne.s32.totalorder %s133, %s136
    %p142 = scmp.eq.s32.totalorder %s19, 0
    %p143 = por %p141, %p142
    %p144 = scmp.ne.s32.totalorder %s133, %s136
    %p145 = scmp.eq.s32.totalorder %s24, 2
    %p146 = por %p144, %p145
    %p147 = scmp.ne.s32.totalorder %s136, %s137
    %p148 = scmp.eq.s32.totalorder %s24, 0
    %p149 = por %p147, %p148
    %p150 = scmp.ne.s32.totalorder %s136, %s137
    %p151 = scmp.eq.s32.totalorder %s25, 2
    %p152 = por %p150, %p151
    %p154 = scmp.ne.s32.totalorder %s137, %s153
    %p155 = scmp.eq.s32.totalorder %s25, 0
    %p156 = por %p154, %p155
    %s157 = ssub.s32 %s19, %s26
    %p158 = scmp.eq.s32.totalorder %s157, 0
    %s160 = sadd.s32 %s159, 1
    %s161 = scalar_select %p158, %s159, %s160
    %p164 = pneg %p158
    %p165 = scmp.eq.s32.totalorder %s19, 2
    %p166 = por %p164, %p165
    %p167 = scmp.ne.s32.totalorder %s159, %s162
    %p168 = scmp.eq.s32.totalorder %s19, 0
    %p169 = por %p167, %p168
    %p170 = scmp.ne.s32.totalorder %s159, %s162
    %p171 = scmp.eq.s32.totalorder %s24, 2
    %p172 = por %p170, %p171
    %p173 = scmp.ne.s32.totalorder %s162, %s163
    %p174 = scmp.eq.s32.totalorder %s24, 0
    %p175 = por %p173, %p174
    %p176 = scmp.ne.s32.totalorder %s162, %s163
    %p177 = scmp.eq.s32.totalorder %s25, 2
    %p178 = por %p176, %p177
    %p180 = scmp.ne.s32.totalorder %s163, %s179
    %p181 = scmp.eq.s32.totalorder %s25, 0
    %p182 = por %p180, %p181
    %s183 = ssub.s32 %s19, %s26
    %p184 = scmp.eq.s32.totalorder %s183, 0
    %s186 = sadd.s32 %s185, 1
    %s187 = scalar_select %p184, %s185, %s186
    %p190 = pneg %p184
    %p191 = scmp.eq.s32.totalorder %s19, 2
    %p192 = por %p190, %p191
    %p193 = scmp.ne.s32.totalorder %s185, %s188
    %p194 = scmp.eq.s32.totalorder %s19, 0
    %p195 = por %p193, %p194
    %p196 = scmp.ne.s32.totalorder %s185, %s188
    %p197 = scmp.eq.s32.totalorder %s24, 2
    %p198 = por %p196, %p197
    %p199 = scmp.ne.s32.totalorder %s188, %s189
    %p200 = scmp.eq.s32.totalorder %s24, 0
    %p201 = por %p199, %p200
    %p202 = scmp.ne.s32.totalorder %s188, %s189
    %p203 = scmp.eq.s32.totalorder %s25, 2
    %p204 = por %p202, %p203
    %p206 = scmp.ne.s32.totalorder %s189, %s205
    %p207 = scmp.eq.s32.totalorder %s25, 0
    %p208 = por %p206, %p207
    %s210 = sadd.s32 %s209, 1
    %p213 = scmp.eq.s32.totalorder %s19, 2
    %p214 = scmp.ne.s32.totalorder %s209, %s211
    %p215 = scmp.eq.s32.totalorder %s19, 0
    %p216 = por %p214, %p215
    %p217 = scmp.ne.s32.totalorder %s209, %s211
    %p218 = scmp.eq.s32.totalorder %s24, 2
    %p219 = por %p217, %p218
    %p220 = scmp.ne.s32.totalorder %s211, %s212
    %p221 = scmp.eq.s32.totalorder %s24, 0
    %p222 = por %p220, %p221
    %p223 = scmp.ne.s32.totalorder %s211, %s212
    %p224 = scmp.eq.s32.totalorder %s25, 2
    %p225 = por %p223, %p224
    %p227 = scmp.ne.s32.totalorder %s212, %s226
    %p228 = scmp.eq.s32.totalorder %s25, 0
    %p229 = por %p227, %p228
    %s231 = sadd.s32 %s230, 1
    %p234 = scmp.eq.s32.totalorder %s19, 2
    %p235 = scmp.ne.s32.totalorder %s230, %s232
    %p236 = scmp.eq.s32.totalorder %s19, 0
    %p237 = por %p235, %p236
    %p238 = scmp.ne.s32.totalorder %s230, %s232
    %p239 = scmp.eq.s32.totalorder %s24, 2
    %p240 = por %p238, %p239
    %p241 = scmp.ne.s32.totalorder %s232, %s233
    %p242 = scmp.eq.s32.totalorder %s24, 0
    %p243 = por %p241, %p242
    %p244 = scmp.ne.s32.totalorder %s232, %s233
    %p245 = scmp.eq.s32.totalorder %s25, 2
    %p246 = por %p244, %p245
    %p248 = scmp.ne.s32.totalorder %s233, %s247
    %p249 = scmp.eq.s32.totalorder %s25, 0
    %p250 = por %p248, %p249
    %s252 = sadd.s32 %s251, 1
    %p255 = scmp.eq.s32.totalorder %s19, 2
    %p256 = scmp.ne.s32.totalorder %s251, %s253
    %p257 = scmp.eq.s32.totalorder %s19, 0
    %p258 = por %p256, %p257
    %p259 = scmp.ne.s32.totalorder %s251, %s253
    %p260 = scmp.eq.s32.totalorder %s24, 2
    %p261 = por %p259, %p260
    %p262 = scmp.ne.s32.totalorder %s253, %s254
    %p263 = scmp.eq.s32.totalorder %s24, 0
    %p264 = por %p262, %p263
    %p265 = scmp.ne.s32.totalorder %s253, %s254
    %p266 = scmp.eq.s32.totalorder %s25, 2
    %p267 = por %p265, %p266
    %p269 = scmp.ne.s32.totalorder %s254, %s268
    %p270 = scmp.eq.s32.totalorder %s25, 0
    %p271 = por %p269, %p270
    %s273 = sadd.s32 %s272, 1
    %p276 = scmp.eq.s32.totalorder %s19, 2
    %p277 = scmp.ne.s32.totalorder %s272, %s274
    %p278 = scmp.eq.s32.totalorder %s19, 0
    %p279 = por %p277, %p278
    %p280 = scmp.ne.s32.totalorder %s272, %s274
    %p281 = scmp.eq.s32.totalorder %s24, 2
    %p282 = por %p280, %p281
    %p283 = scmp.ne.s32.totalorder %s274, %s275
    %p284 = scmp.eq.s32.totalorder %s24, 0
    %p285 = por %p283, %p284
    %p286 = scmp.ne.s32.totalorder %s274, %s275
    %p287 = scmp.eq.s32.totalorder %s25, 2
    %p288 = por %p286, %p287
    %p290 = scmp.ne.s32.totalorder %s275, %s289
    %p291 = scmp.eq.s32.totalorder %s25, 0
    %p292 = por %p290, %p291
    %s294 = sadd.s32 %s293, 1
    %p297 = scmp.eq.s32.totalorder %s19, 2
    %p298 = scmp.ne.s32.totalorder %s293, %s295
    %p299 = scmp.eq.s32.totalorder %s19, 0
    %p300 = por %p298, %p299
    %p301 = scmp.ne.s32.totalorder %s293, %s295
    %p302 = scmp.eq.s32.totalorder %s24, 2
    %p303 = por %p301, %p302
    %p304 = scmp.ne.s32.totalorder %s295, %s296
    %p305 = scmp.eq.s32.totalorder %s24, 0
    %p306 = por %p304, %p305
    %p307 = scmp.ne.s32.totalorder %s295, %s296
    %p308 = scmp.eq.s32.totalorder %s25, 2
    %p309 = por %p307, %p308
    %p311 = scmp.ne.s32.totalorder %s296, %s310
    %p312 = scmp.eq.s32.totalorder %s25, 0
    %p313 = por %p311, %p312
    %s315 = sadd.s32 %s314, 1
    %p318 = scmp.eq.s32.totalorder %s19, 2
    %p319 = scmp.ne.s32.totalorder %s314, %s316
    %p320 = scmp.eq.s32.totalorder %s19, 0
    %p321 = por %p319, %p320
    %p322 = scmp.ne.s32.totalorder %s314, %s316
    %p323 = scmp.eq.s32.totalorder %s24, 2
    %p324 = por %p322, %p323
    %p325 = scmp.ne.s32.totalorder %s316, %s317
    %p326 = scmp.eq.s32.totalorder %s24, 0
    %p327 = por %p325, %p326
    %p328 = scmp.ne.s32.totalorder %s316, %s317
    %p329 = scmp.eq.s32.totalorder %s25, 2
    %p330 = por %p328, %p329
    %p332 = scmp.ne.s32.totalorder %s317, %s331
    %p333 = scmp.eq.s32.totalorder %s25, 0
    %p334 = por %p332, %p333
    %p335 = scmp.le.s32.totalorder 1, %s19
    %p336 = scmp.lt.s32.totalorder %s19, 4
    %p337 = pnand %p335, %p336
    %p338 = pneg %p337
    // Predicated region
    $region9: #{gnn_graphpred_forward.1} parent=5 // pred_check
      _
    $region10: #{gnn_graphpred_forward.1} parent=5 // pred_check_branch
      %340 = sbr.rel (%p337) target = $region12
    $region11: #{gnn_graphpred_forward.1} parent=5 // pred_region
      %s341 = ssub.s32 %s19, 1
      // Predicated region
      $region13: #{gnn_graphpred_forward.1} parent=11 // pred_check
        %p342 = pneg %p222
      $region14: #{gnn_graphpred_forward.1} parent=11 // pred_check_branch
        %344 = sbr.rel (%p342) target = $region16
      $region15: #{gnn_graphpred_forward.1} parent=11 // pred_region
        _
      $region16: #{gnn_graphpred_forward.1} parent=11 // pred_fallthru
        _
      // Predicated region
      $region17: #{gnn_graphpred_forward.1} parent=11 // pred_check
        %p345 = pneg %p243
      $region18: #{gnn_graphpred_forward.1} parent=11 // pred_check_branch
        %347 = sbr.rel (%p345) target = $region20
      $region19: #{gnn_graphpred_forward.1} parent=11 // pred_region
        _
      $region20: #{gnn_graphpred_forward.1} parent=11 // pred_fallthru
        _
      // Predicated region
      $region21: #{gnn_graphpred_forward.1} parent=11 // pred_check
        %p348 = pneg %p264
      $region22: #{gnn_graphpred_forward.1} parent=11 // pred_check_branch
        %350 = sbr.rel (%p348) target = $region24
      $region23: #{gnn_graphpred_forward.1} parent=11 // pred_region
        _
      $region24: #{gnn_graphpred_forward.1} parent=11 // pred_fallthru
        _
      // Predicated region
      $region25: #{gnn_graphpred_forward.1} parent=11 // pred_check
        %p351 = pneg %p285
      $region26: #{gnn_graphpred_forward.1} parent=11 // pred_check_branch
        %353 = sbr.rel (%p351) target = $region28
      $region27: #{gnn_graphpred_forward.1} parent=11 // pred_region
        _
      $region28: #{gnn_graphpred_forward.1} parent=11 // pred_fallthru
        _
      // Predicated region
      $region29: #{gnn_graphpred_forward.1} parent=11 // pred_check
        %p354 = pneg %p306
      $region30: #{gnn_graphpred_forward.1} parent=11 // pred_check_branch
        %356 = sbr.rel (%p354) target = $region32
      $region31: #{gnn_graphpred_forward.1} parent=11 // pred_region
        _
      $region32: #{gnn_graphpred_forward.1} parent=11 // pred_fallthru
        _
    $region12: #{gnn_graphpred_forward.1} parent=5 // pred_fallthru
      _
    %p357 = scmp.lt.s32.totalorder %s19, 3
    // Predicated region
    $region33: #{gnn_graphpred_forward.1} parent=5 // pred_check
      %p358 = pneg %p357
    $region34: #{gnn_graphpred_forward.1} parent=5 // pred_check_branch
      %360 = sbr.rel (%p358) target = $region36
    $region35: #{gnn_graphpred_forward.1} parent=5 // pred_region
      // Predicated region
      $region37: #{gnn_graphpred_forward.1} parent=35 // pred_check
        %p361 = pneg %p39
      $region38: #{gnn_graphpred_forward.1} parent=35 // pred_check_branch
        %363 = sbr.rel (%p361) target = $region40
      $region39: #{gnn_graphpred_forward.1} parent=35 // pred_region
        %p364 = scmp.lt.s32.totalorder %s19, 2
        %s365 = scalar_select %p364, %s19, 2
        %s366 = smul.addr %s365, 32
        %s367 = smul.addr %s366, 8
        %s368 = scalar_lea.vmem %s1, %s367
      $region40: #{gnn_graphpred_forward.1} parent=35 // pred_fallthru
        _
      // Predicated region
      $region41: #{gnn_graphpred_forward.1} parent=35 // pred_check
        %p369 = pneg %p65
      $region42: #{gnn_graphpred_forward.1} parent=35 // pred_check_branch
        %371 = sbr.rel (%p369) target = $region44
      $region43: #{gnn_graphpred_forward.1} parent=35 // pred_region
        %p372 = scmp.lt.s32.totalorder %s19, 2
        %s373 = scalar_select %p372, %s19, 2
        %s374 = smul.addr %s373, 16
        %s375 = smul.addr %s374, 4
        %s376 = scalar_lea.vmem %s2, %s375
      $region44: #{gnn_graphpred_forward.1} parent=35 // pred_fallthru
        _
      // Predicated region
      $region45: #{gnn_graphpred_forward.1} parent=35 // pred_check
        %p377 = pneg %p91
      $region46: #{gnn_graphpred_forward.1} parent=35 // pred_check_branch
        %379 = sbr.rel (%p377) target = $region48
      $region47: #{gnn_graphpred_forward.1} parent=35 // pred_region
        %p380 = scmp.lt.s32.totalorder %s19, 2
        %s381 = scalar_select %p380, %s19, 2
        %s382 = scalar_lea.vmem %s3, %s381
      $region48: #{gnn_graphpred_forward.1} parent=35 // pred_fallthru
        _
      // Predicated region
      $region49: #{gnn_graphpred_forward.1} parent=35 // pred_check
        %p383 = pneg %p117
      $region50: #{gnn_graphpred_forward.1} parent=35 // pred_check_branch
        %385 = sbr.rel (%p383) target = $region52
      $region51: #{gnn_graphpred_forward.1} parent=35 // pred_region
        %p386 = scmp.lt.s32.totalorder %s19, 2
        %s387 = scalar_select %p386, %s19, 2
        %s388 = smul.addr %s387, 16
        %s389 = smul.addr %s388, 4
        %s390 = scalar_lea.vmem %s4, %s389
      $region52: #{gnn_graphpred_forward.1} parent=35 // pred_fallthru
        _
      // Predicated region
      $region53: #{gnn_graphpred_forward.1} parent=35 // pred_check
        %p391 = pneg %p143
      $region54: #{gnn_graphpred_forward.1} parent=35 // pred_check_branch
        %393 = sbr.rel (%p391) target = $region56
      $region55: #{gnn_graphpred_forward.1} parent=35 // pred_region
        %p394 = scmp.lt.s32.totalorder %s19, 2
        %s395 = scalar_select %p394, %s19, 2
        %s396 = scalar_lea.vmem %s5, %s395
      $region56: #{gnn_graphpred_forward.1} parent=35 // pred_fallthru
        _
      // Predicated region
      $region57: #{gnn_graphpred_forward.1} parent=35 // pred_check
        %p397 = pneg %p169
      $region58: #{gnn_graphpred_forward.1} parent=35 // pred_check_branch
        %399 = sbr.rel (%p397) target = $region60
      $region59: #{gnn_graphpred_forward.1} parent=35 // pred_region
        %p400 = scmp.lt.s32.totalorder %s19, 2
        %s401 = scalar_select %p400, %s19, 2
        %s402 = scalar_lea.vmem %s6, %s401
      $region60: #{gnn_graphpred_forward.1} parent=35 // pred_fallthru
        _
      // Predicated region
      $region61: #{gnn_graphpred_forward.1} parent=35 // pred_check
        %p403 = pneg %p195
      $region62: #{gnn_graphpred_forward.1} parent=35 // pred_check_branch
        %405 = sbr.rel (%p403) target = $region64
      $region63: #{gnn_graphpred_forward.1} parent=35 // pred_region
        %p406 = scmp.lt.s32.totalorder %s19, 2
        %s407 = scalar_select %p406, %s19, 2
        %s408 = scalar_lea.vmem %s7, %s407
      $region64: #{gnn_graphpred_forward.1} parent=35 // pred_fallthru
        _
    $region36: #{gnn_graphpred_forward.1} parent=5 // pred_fallthru
      _
    %p409 = scmp.le.s32.totalorder 1, %s19
    %p410 = scmp.lt.s32.totalorder %s19, 4
    %p411 = pnand %p409, %p410
    %p412 = pneg %p411
    // Predicated region
    $region65: #{gnn_graphpred_forward.1} parent=5 // pred_check
      _
    $region66: #{gnn_graphpred_forward.1} parent=5 // pred_check_branch
      %414 = sbr.rel (%p411) target = $region68
    $region67: #{gnn_graphpred_forward.1} parent=5 // pred_region
      %s415 = ssub.s32 %s19, 1
      %p416 = scmp.lt.s32.totalorder %s24, 2
      %s417 = scalar_select %p416, %s24, 2
      %s418 = smul.addr %s417, 32
      %s419 = smul.addr %s418, 8
      %s420 = scalar_lea.vmem %s1, %s419
      %p421 = pneg %p45
      %p422 = pneg %p42
      %p423 = scmp.lt.s32.totalorder %s24, 2
      %s424 = scalar_select %p423, %s24, 2
      %s425 = smul.addr %s424, 16
      %s426 = smul.addr %s425, 4
      %s427 = scalar_lea.vmem %s2, %s426
      %p428 = pneg %p71
      %p429 = pneg %p68
      %p430 = scmp.lt.s32.totalorder %s24, 2
      %s431 = scalar_select %p430, %s24, 2
      %s432 = scalar_lea.vmem %s3, %s431
      %p433 = pneg %p97
      %p434 = pneg %p94
      %p435 = scmp.lt.s32.totalorder %s24, 2
      %s436 = scalar_select %p435, %s24, 2
      %s437 = smul.addr %s436, 16
      %s438 = smul.addr %s437, 4
      %s439 = scalar_lea.vmem %s4, %s438
      %p440 = pneg %p123
      %p441 = pneg %p120
      %p442 = scmp.lt.s32.totalorder %s24, 2
      %s443 = scalar_select %p442, %s24, 2
      %s444 = scalar_lea.vmem %s5, %s443
      %p445 = pneg %p149
      %p446 = pneg %p146
      %p447 = scmp.lt.s32.totalorder %s24, 2
      %s448 = scalar_select %p447, %s24, 2
      %s449 = scalar_lea.vmem %s6, %s448
      %p450 = pneg %p175
      %p451 = pneg %p172
      %p452 = scmp.lt.s32.totalorder %s24, 2
      %s453 = scalar_select %p452, %s24, 2
      %s454 = scalar_lea.vmem %s7, %s453
      %p455 = pneg %p201
      %p456 = pneg %p198
      %p457 = pneg %p222
      %p458 = pneg %p219
      %p459 = pneg %p243
      %p460 = pneg %p240
      %p461 = pneg %p264
      %p462 = pneg %p261
      %p463 = pneg %p285
      %p464 = pneg %p282
      %p465 = pneg %p306
      %p466 = pneg %p303
      %p467 = pneg %p327
      %p468 = pneg %p324
      %p469 = scmp.lt.s32.totalorder %s24, 2
      %s470 = scalar_select %p469, %s24, 2
      %s471 = smul.addr %s470, 32
      %s472 = smul.addr %s471, 8
      %s473 = scalar_lea.vmem %s1, %s472
      %p474 = scmp.lt.s32.totalorder %s24, 2
      %s475 = scalar_select %p474, %s24, 2
      %s476 = smul.addr %s475, 16
      %s477 = smul.addr %s476, 4
      %s478 = scalar_lea.vmem %s2, %s477
      %p479 = scmp.lt.s32.totalorder %s24, 2
      %s480 = scalar_select %p479, %s24, 2
      %s481 = scalar_lea.vmem %s3, %s480
      %p482 = scmp.lt.s32.totalorder %s24, 2
      %s483 = scalar_select %p482, %s24, 2
      %s484 = smul.addr %s483, 16
      %s485 = smul.addr %s484, 4
      %s486 = scalar_lea.vmem %s4, %s485
      %p487 = scmp.lt.s32.totalorder %s24, 2
      %s488 = scalar_select %p487, %s24, 2
      %s489 = scalar_lea.vmem %s5, %s488
      %p490 = scmp.lt.s32.totalorder %s24, 2
      %s491 = scalar_select %p490, %s24, 2
      %s492 = scalar_lea.vmem %s6, %s491
      %p493 = scmp.lt.s32.totalorder %s24, 2
      %s494 = scalar_select %p493, %s24, 2
      %s495 = scalar_lea.vmem %s7, %s494
      %p497 = scmp.eq.s32.totalorder %s24, 0
      // Predicated region
      $region69: #{gnn_graphpred_forward.1} parent=67 // pred_check
        %p498 = pneg %p497
      $region70: #{gnn_graphpred_forward.1} parent=67 // pred_check_branch
        %500 = sbr.rel (%p498) target = $region72
      $region71: #{gnn_graphpred_forward.1} parent=67 // pred_region
        %p502 = scmp.lt.u32.totalorder 4, 8
        %p503 = pneg %p502
        // Predicated region
        $region73: #{gnn_graphpred_forward.1} parent=71 // pred_check
          _
        $region74: #{gnn_graphpred_forward.1} parent=71 // pred_check_branch
          %505 = sbr.rel (%p502) target = $region76
        $region75: #{gnn_graphpred_forward.1} parent=71 // pred_region
          %s646 = sand.u32 4, 7
          %p647 = scmp.eq.s32.totalorder %s646, 0
          %p648 = pneg %p647
          // Predicated region
          $region88: #{gnn_graphpred_forward.1} parent=75 // pred_check
            _
          $region89: #{gnn_graphpred_forward.1} parent=75 // pred_check_branch
            %650 = sbr.rel (%p647) target = $region91
          $region90: #{gnn_graphpred_forward.1} parent=75 // pred_region
            %s651 = sand.u32 4, 7
            %s652 = ssub.s32 4, %s651
            %s653 = scalar_lea.vmem %s0, %s652
            %s654 = ssub.s32 4, %s651
            %s655 = scalar_lea.vmem [#allocation2], %s654
            loop: start=0, step=1, limit=1
            $region92: #{gnn_graphpred_forward.1} parent=90 // loop_pre_header
              _
            $region93: #{gnn_graphpred_forward.1} parent=90 // loop_header
              %s657 = sphi 0, %s661
              %p658 = scmp.ge.s32.totalorder %s657, 1
              %s662 = sphi %s0, %s0
              %s663 = sphi [#allocation2], [#allocation2]
            $region94: #{gnn_graphpred_forward.1} parent=90 // loop_header_branch
              %660 = sbr.rel (%p658) target = $region98
            $region95: #{gnn_graphpred_forward.1} parent=90 // loop_body
              _
            $region96: #{gnn_graphpred_forward.1} parent=90 // loop_footer
              %s661 = sadd.s32 1, %s657
            $region97: #{gnn_graphpred_forward.1} parent=90 // loop_footer_branch
              %656 = sbr.rel target = $region93
            $region98: #{gnn_graphpred_forward.1} parent=90 // loop_exit
              _
            %s664 = sshllo.u32 0, %s651
            loop: start=0, step=1, limit=1
            $region99: #{gnn_graphpred_forward.1} parent=90 // loop_pre_header
              _
            $region100: #{gnn_graphpred_forward.1} parent=90 // loop_header
              %s666 = sphi 0, %s670
              %p667 = scmp.ge.s32.totalorder %s666, 1
              %s671 = sphi %s653, %s653
              %s672 = sphi %s655, %s655
            $region101: #{gnn_graphpred_forward.1} parent=90 // loop_header_branch
              %669 = sbr.rel (%p667) target = $region105
            $region102: #{gnn_graphpred_forward.1} parent=90 // loop_body
              %v673 = vld [vmem:[%s671] sm:%s664]
              %674 = vst [vmem:[%s672] sm:%s664] %v673
              %v675 = vld [vmem:[%s671 + $0x8] sm:%s664]
              %676 = vst [vmem:[%s672 + $0x4] sm:%s664] %v675
              %v677 = vld [vmem:[%s671 + $0x4] sm:%s664]
              %678 = vst [vmem:[%s672 + $0x8] sm:%s664] %v677
              %v679 = vld [vmem:[%s671 + $0xc] sm:%s664]
              %680 = vst [vmem:[%s672 + $0xc] sm:%s664] %v679
              %v681 = vld [vmem:[%s671 + $0x10] sm:%s664]
              %682 = vst [vmem:[%s672 + $0x10] sm:%s664] %v681
              %v683 = vld [vmem:[%s671 + $0x18] sm:%s664]
              %684 = vst [vmem:[%s672 + $0x14] sm:%s664] %v683
              %v685 = vld [vmem:[%s671 + $0x14] sm:%s664]
              %686 = vst [vmem:[%s672 + $0x18] sm:%s664] %v685
              %v687 = vld [vmem:[%s671 + $0x1c] sm:%s664]
              %688 = vst [vmem:[%s672 + $0x1c] sm:%s664] %v687
              %v689 = vld [vmem:[%s671 + $0x20] sm:%s664]
              %690 = vst [vmem:[%s672 + $0x20] sm:%s664] %v689
              %v691 = vld [vmem:[%s671 + $0x28] sm:%s664]
              %692 = vst [vmem:[%s672 + $0x24] sm:%s664] %v691
              %v693 = vld [vmem:[%s671 + $0x24] sm:%s664]
              %694 = vst [vmem:[%s672 + $0x28] sm:%s664] %v693
              %v695 = vld [vmem:[%s671 + $0x2c] sm:%s664]
              %696 = vst [vmem:[%s672 + $0x2c] sm:%s664] %v695
              %v697 = vld [vmem:[%s671 + $0x30] sm:%s664]
              %698 = vst [vmem:[%s672 + $0x30] sm:%s664] %v697
              %v699 = vld [vmem:[%s671 + $0x38] sm:%s664]
              %700 = vst [vmem:[%s672 + $0x34] sm:%s664] %v699
              %v701 = vld [vmem:[%s671 + $0x34] sm:%s664]
              %702 = vst [vmem:[%s672 + $0x38] sm:%s664] %v701
              %v703 = vld [vmem:[%s671 + $0x3c] sm:%s664]
              %704 = vst [vmem:[%s672 + $0x3c] sm:%s664] %v703
              %v705 = vld [vmem:[%s671 + $0x40] sm:%s664]
              %706 = vst [vmem:[%s672 + $0x40] sm:%s664] %v705
              %v707 = vld [vmem:[%s671 + $0x48] sm:%s664]
              %708 = vst [vmem:[%s672 + $0x44] sm:%s664] %v707
              %v709 = vld [vmem:[%s671 + $0x44] sm:%s664]
              %710 = vst [vmem:[%s672 + $0x48] sm:%s664] %v709
              %v711 = vld [vmem:[%s671 + $0x4c] sm:%s664]
              %712 = vst [vmem:[%s672 + $0x4c] sm:%s664] %v711
              %v713 = vld [vmem:[%s671 + $0x50] sm:%s664]
              %714 = vst [vmem:[%s672 + $0x50] sm:%s664] %v713
              %v715 = vld [vmem:[%s671 + $0x58] sm:%s664]
              %716 = vst [vmem:[%s672 + $0x54] sm:%s664] %v715
              %v717 = vld [vmem:[%s671 + $0x54] sm:%s664]
              %718 = vst [vmem:[%s672 + $0x58] sm:%s664] %v717
              %v719 = vld [vmem:[%s671 + $0x5c] sm:%s664]
              %720 = vst [vmem:[%s672 + $0x5c] sm:%s664] %v719
              %v721 = vld [vmem:[%s671 + $0x60] sm:%s664]
              %722 = vst [vmem:[%s672 + $0x60] sm:%s664] %v721
              %v723 = vld [vmem:[%s671 + $0x68] sm:%s664]
              %724 = vst [vmem:[%s672 + $0x64] sm:%s664] %v723
              %v725 = vld [vmem:[%s671 + $0x64] sm:%s664]
              %726 = vst [vmem:[%s672 + $0x68] sm:%s664] %v725
              %v727 = vld [vmem:[%s671 + $0x6c] sm:%s664]
              %728 = vst [vmem:[%s672 + $0x6c] sm:%s664] %v727
              %v729 = vld [vmem:[%s671 + $0x70] sm:%s664]
              %730 = vst [vmem:[%s672 + $0x70] sm:%s664] %v729
              %v731 = vld [vmem:[%s671 + $0x78] sm:%s664]
              %732 = vst [vmem:[%s672 + $0x74] sm:%s664] %v731
              %v733 = vld [vmem:[%s671 + $0x74] sm:%s664]
              %734 = vst [vmem:[%s672 + $0x78] sm:%s664] %v733
              %v735 = vld [vmem:[%s671 + $0x7c] sm:%s664]
              %736 = vst [vmem:[%s672 + $0x7c] sm:%s664] %v735
              %v737 = vld [vmem:[%s671 + $0x80] sm:%s664]
              %738 = vst [vmem:[%s672 + $0x80] sm:%s664] %v737
              %v739 = vld [vmem:[%s671 + $0x88] sm:%s664]
              %740 = vst [vmem:[%s672 + $0x84] sm:%s664] %v739
              %v741 = vld [vmem:[%s671 + $0x84] sm:%s664]
              %742 = vst [vmem:[%s672 + $0x88] sm:%s664] %v741
              %v743 = vld [vmem:[%s671 + $0x8c] sm:%s664]
              %744 = vst [vmem:[%s672 + $0x8c] sm:%s664] %v743
              %v745 = vld [vmem:[%s671 + $0x90] sm:%s664]
              %746 = vst [vmem:[%s672 + $0x90] sm:%s664] %v745
              %v747 = vld [vmem:[%s671 + $0x98] sm:%s664]
              %748 = vst [vmem:[%s672 + $0x94] sm:%s664] %v747
              %v749 = vld [vmem:[%s671 + $0x94] sm:%s664]
              %750 = vst [vmem:[%s672 + $0x98] sm:%s664] %v749
              %v751 = vld [vmem:[%s671 + $0x9c] sm:%s664]
              %752 = vst [vmem:[%s672 + $0x9c] sm:%s664] %v751
              %v753 = vld [vmem:[%s671 + $0xa0] sm:%s664]
              %754 = vst [vmem:[%s672 + $0xa0] sm:%s664] %v753
              %v755 = vld [vmem:[%s671 + $0xa8] sm:%s664]
              %756 = vst [vmem:[%s672 + $0xa4] sm:%s664] %v755
              %v757 = vld [vmem:[%s671 + $0xa4] sm:%s664]
              %758 = vst [vmem:[%s672 + $0xa8] sm:%s664] %v757
              %v759 = vld [vmem:[%s671 + $0xac] sm:%s664]
              %760 = vst [vmem:[%s672 + $0xac] sm:%s664] %v759
              %v761 = vld [vmem:[%s671 + $0xb0] sm:%s664]
              %762 = vst [vmem:[%s672 + $0xb0] sm:%s664] %v761
              %v763 = vld [vmem:[%s671 + $0xb8] sm:%s664]
              %764 = vst [vmem:[%s672 + $0xb4] sm:%s664] %v763
              %v765 = vld [vmem:[%s671 + $0xb4] sm:%s664]
              %766 = vst [vmem:[%s672 + $0xb8] sm:%s664] %v765
              %v767 = vld [vmem:[%s671 + $0xbc] sm:%s664]
              %768 = vst [vmem:[%s672 + $0xbc] sm:%s664] %v767
              %v769 = vld [vmem:[%s671 + $0xc0] sm:%s664]
              %770 = vst [vmem:[%s672 + $0xc0] sm:%s664] %v769
              %v771 = vld [vmem:[%s671 + $0xc8] sm:%s664]
              %772 = vst [vmem:[%s672 + $0xc4] sm:%s664] %v771
              %v773 = vld [vmem:[%s671 + $0xc4] sm:%s664]
              %774 = vst [vmem:[%s672 + $0xc8] sm:%s664] %v773
              %v775 = vld [vmem:[%s671 + $0xcc] sm:%s664]
              %776 = vst [vmem:[%s672 + $0xcc] sm:%s664] %v775
              %v777 = vld [vmem:[%s671 + $0xd0] sm:%s664]
              %778 = vst [vmem:[%s672 + $0xd0] sm:%s664] %v777
              %v779 = vld [vmem:[%s671 + $0xd8] sm:%s664]
              %780 = vst [vmem:[%s672 + $0xd4] sm:%s664] %v779
              %v781 = vld [vmem:[%s671 + $0xd4] sm:%s664]
              %782 = vst [vmem:[%s672 + $0xd8] sm:%s664] %v781
              %v783 = vld [vmem:[%s671 + $0xdc] sm:%s664]
              %784 = vst [vmem:[%s672 + $0xdc] sm:%s664] %v783
              %v785 = vld [vmem:[%s671 + $0xe0] sm:%s664]
              %786 = vst [vmem:[%s672 + $0xe0] sm:%s664] %v785
              %v787 = vld [vmem:[%s671 + $0xe8] sm:%s664]
              %788 = vst [vmem:[%s672 + $0xe4] sm:%s664] %v787
              %v789 = vld [vmem:[%s671 + $0xe4] sm:%s664]
              %790 = vst [vmem:[%s672 + $0xe8] sm:%s664] %v789
              %v791 = vld [vmem:[%s671 + $0xec] sm:%s664]
              %792 = vst [vmem:[%s672 + $0xec] sm:%s664] %v791
              %v793 = vld [vmem:[%s671 + $0xf0] sm:%s664]
              %794 = vst [vmem:[%s672 + $0xf0] sm:%s664] %v793
              %v795 = vld [vmem:[%s671 + $0xf8] sm:%s664]
              %796 = vst [vmem:[%s672 + $0xf4] sm:%s664] %v795
              %v797 = vld [vmem:[%s671 + $0xf4] sm:%s664]
              %798 = vst [vmem:[%s672 + $0xf8] sm:%s664] %v797
              %v799 = vld [vmem:[%s671 + $0xfc] sm:%s664]
              %800 = vst [vmem:[%s672 + $0xfc] sm:%s664] %v799
            $region103: #{gnn_graphpred_forward.1} parent=90 // loop_footer
              %s670 = sadd.s32 1, %s666
            $region104: #{gnn_graphpred_forward.1} parent=90 // loop_footer_branch
              %665 = sbr.rel target = $region100
            $region105: #{gnn_graphpred_forward.1} parent=90 // loop_exit
              _
          $region91: #{gnn_graphpred_forward.1} parent=75 // pred_fallthru
            _
        $region76: #{gnn_graphpred_forward.1} parent=71 // pred_fallthru
          _
        // Predicated region
        $region77: #{gnn_graphpred_forward.1} parent=71 // pred_check
          %p506 = pneg %p502
        $region78: #{gnn_graphpred_forward.1} parent=71 // pred_check_branch
          %508 = sbr.rel (%p506) target = $region80
        $region79: #{gnn_graphpred_forward.1} parent=71 // pred_region
          %s509 = sshllo.u32 0, 4
          loop: start=0, step=1, limit=1
          $region81: #{gnn_graphpred_forward.1} parent=79 // loop_pre_header
            _
          $region82: #{gnn_graphpred_forward.1} parent=79 // loop_header
            %s511 = sphi 0, %s515
            %p512 = scmp.ge.s32.totalorder %s511, 1
            %s516 = sphi %s0, %s0
            %s517 = sphi [#allocation2], [#allocation2]
          $region83: #{gnn_graphpred_forward.1} parent=79 // loop_header_branch
            %514 = sbr.rel (%p512) target = $region87
          $region84: #{gnn_graphpred_forward.1} parent=79 // loop_body
            %v518 = vld [vmem:[%s516] sm:%s509]
            %519 = vst [vmem:[%s517] sm:%s509] %v518
            %v520 = vld [vmem:[%s516 + $0x8] sm:%s509]
            %521 = vst [vmem:[%s517 + $0x4] sm:%s509] %v520
            %v522 = vld [vmem:[%s516 + $0x4] sm:%s509]
            %523 = vst [vmem:[%s517 + $0x8] sm:%s509] %v522
            %v524 = vld [vmem:[%s516 + $0xc] sm:%s509]
            %525 = vst [vmem:[%s517 + $0xc] sm:%s509] %v524
            %v526 = vld [vmem:[%s516 + $0x10] sm:%s509]
            %527 = vst [vmem:[%s517 + $0x10] sm:%s509] %v526
            %v528 = vld [vmem:[%s516 + $0x18] sm:%s509]
            %529 = vst [vmem:[%s517 + $0x14] sm:%s509] %v528
            %v530 = vld [vmem:[%s516 + $0x14] sm:%s509]
            %531 = vst [vmem:[%s517 + $0x18] sm:%s509] %v530
            %v532 = vld [vmem:[%s516 + $0x1c] sm:%s509]
            %533 = vst [vmem:[%s517 + $0x1c] sm:%s509] %v532
            %v534 = vld [vmem:[%s516 + $0x20] sm:%s509]
            %535 = vst [vmem:[%s517 + $0x20] sm:%s509] %v534
            %v536 = vld [vmem:[%s516 + $0x28] sm:%s509]
            %537 = vst [vmem:[%s517 + $0x24] sm:%s509] %v536
            %v538 = vld [vmem:[%s516 + $0x24] sm:%s509]
            %539 = vst [vmem:[%s517 + $0x28] sm:%s509] %v538
            %v540 = vld [vmem:[%s516 + $0x2c] sm:%s509]
            %541 = vst [vmem:[%s517 + $0x2c] sm:%s509] %v540
            %v542 = vld [vmem:[%s516 + $0x30] sm:%s509]
            %543 = vst [vmem:[%s517 + $0x30] sm:%s509] %v542
            %v544 = vld [vmem:[%s516 + $0x38] sm:%s509]
            %545 = vst [vmem:[%s517 + $0x34] sm:%s509] %v544
            %v546 = vld [vmem:[%s516 + $0x34] sm:%s509]
            %547 = vst [vmem:[%s517 + $0x38] sm:%s509] %v546
            %v548 = vld [vmem:[%s516 + $0x3c] sm:%s509]
            %549 = vst [vmem:[%s517 + $0x3c] sm:%s509] %v548
            %v550 = vld [vmem:[%s516 + $0x40] sm:%s509]
            %551 = vst [vmem:[%s517 + $0x40] sm:%s509] %v550
            %v552 = vld [vmem:[%s516 + $0x48] sm:%s509]
            %553 = vst [vmem:[%s517 + $0x44] sm:%s509] %v552
            %v554 = vld [vmem:[%s516 + $0x44] sm:%s509]
            %555 = vst [vmem:[%s517 + $0x48] sm:%s509] %v554
            %v556 = vld [vmem:[%s516 + $0x4c] sm:%s509]
            %557 = vst [vmem:[%s517 + $0x4c] sm:%s509] %v556
            %v558 = vld [vmem:[%s516 + $0x50] sm:%s509]
            %559 = vst [vmem:[%s517 + $0x50] sm:%s509] %v558
            %v560 = vld [vmem:[%s516 + $0x58] sm:%s509]
            %561 = vst [vmem:[%s517 + $0x54] sm:%s509] %v560
            %v562 = vld [vmem:[%s516 + $0x54] sm:%s509]
            %563 = vst [vmem:[%s517 + $0x58] sm:%s509] %v562
            %v564 = vld [vmem:[%s516 + $0x5c] sm:%s509]
            %565 = vst [vmem:[%s517 + $0x5c] sm:%s509] %v564
            %v566 = vld [vmem:[%s516 + $0x60] sm:%s509]
            %567 = vst [vmem:[%s517 + $0x60] sm:%s509] %v566
            %v568 = vld [vmem:[%s516 + $0x68] sm:%s509]
            %569 = vst [vmem:[%s517 + $0x64] sm:%s509] %v568
            %v570 = vld [vmem:[%s516 + $0x64] sm:%s509]
            %571 = vst [vmem:[%s517 + $0x68] sm:%s509] %v570
            %v572 = vld [vmem:[%s516 + $0x6c] sm:%s509]
            %573 = vst [vmem:[%s517 + $0x6c] sm:%s509] %v572
            %v574 = vld [vmem:[%s516 + $0x70] sm:%s509]
            %575 = vst [vmem:[%s517 + $0x70] sm:%s509] %v574
            %v576 = vld [vmem:[%s516 + $0x78] sm:%s509]
            %577 = vst [vmem:[%s517 + $0x74] sm:%s509] %v576
            %v578 = vld [vmem:[%s516 + $0x74] sm:%s509]
            %579 = vst [vmem:[%s517 + $0x78] sm:%s509] %v578
            %v580 = vld [vmem:[%s516 + $0x7c] sm:%s509]
            %581 = vst [vmem:[%s517 + $0x7c] sm:%s509] %v580
            %v582 = vld [vmem:[%s516 + $0x80] sm:%s509]
            %583 = vst [vmem:[%s517 + $0x80] sm:%s509] %v582
            %v584 = vld [vmem:[%s516 + $0x88] sm:%s509]
            %585 = vst [vmem:[%s517 + $0x84] sm:%s509] %v584
            %v586 = vld [vmem:[%s516 + $0x84] sm:%s509]
            %587 = vst [vmem:[%s517 + $0x88] sm:%s509] %v586
            %v588 = vld [vmem:[%s516 + $0x8c] sm:%s509]
            %589 = vst [vmem:[%s517 + $0x8c] sm:%s509] %v588
            %v590 = vld [vmem:[%s516 + $0x90] sm:%s509]
            %591 = vst [vmem:[%s517 + $0x90] sm:%s509] %v590
            %v592 = vld [vmem:[%s516 + $0x98] sm:%s509]
            %593 = vst [vmem:[%s517 + $0x94] sm:%s509] %v592
            %v594 = vld [vmem:[%s516 + $0x94] sm:%s509]
            %595 = vst [vmem:[%s517 + $0x98] sm:%s509] %v594
            %v596 = vld [vmem:[%s516 + $0x9c] sm:%s509]
            %597 = vst [vmem:[%s517 + $0x9c] sm:%s509] %v596
            %v598 = vld [vmem:[%s516 + $0xa0] sm:%s509]
            %599 = vst [vmem:[%s517 + $0xa0] sm:%s509] %v598
            %v600 = vld [vmem:[%s516 + $0xa8] sm:%s509]
            %601 = vst [vmem:[%s517 + $0xa4] sm:%s509] %v600
            %v602 = vld [vmem:[%s516 + $0xa4] sm:%s509]
            %603 = vst [vmem:[%s517 + $0xa8] sm:%s509] %v602
            %v604 = vld [vmem:[%s516 + $0xac] sm:%s509]
            %605 = vst [vmem:[%s517 + $0xac] sm:%s509] %v604
            %v606 = vld [vmem:[%s516 + $0xb0] sm:%s509]
            %607 = vst [vmem:[%s517 + $0xb0] sm:%s509] %v606
            %v608 = vld [vmem:[%s516 + $0xb8] sm:%s509]
            %609 = vst [vmem:[%s517 + $0xb4] sm:%s509] %v608
            %v610 = vld [vmem:[%s516 + $0xb4] sm:%s509]
            %611 = vst [vmem:[%s517 + $0xb8] sm:%s509] %v610
            %v612 = vld [vmem:[%s516 + $0xbc] sm:%s509]
            %613 = vst [vmem:[%s517 + $0xbc] sm:%s509] %v612
            %v614 = vld [vmem:[%s516 + $0xc0] sm:%s509]
            %615 = vst [vmem:[%s517 + $0xc0] sm:%s509] %v614
            %v616 = vld [vmem:[%s516 + $0xc8] sm:%s509]
            %617 = vst [vmem:[%s517 + $0xc4] sm:%s509] %v616
            %v618 = vld [vmem:[%s516 + $0xc4] sm:%s509]
            %619 = vst [vmem:[%s517 + $0xc8] sm:%s509] %v618
            %v620 = vld [vmem:[%s516 + $0xcc] sm:%s509]
            %621 = vst [vmem:[%s517 + $0xcc] sm:%s509] %v620
            %v622 = vld [vmem:[%s516 + $0xd0] sm:%s509]
            %623 = vst [vmem:[%s517 + $0xd0] sm:%s509] %v622
            %v624 = vld [vmem:[%s516 + $0xd8] sm:%s509]
            %625 = vst [vmem:[%s517 + $0xd4] sm:%s509] %v624
            %v626 = vld [vmem:[%s516 + $0xd4] sm:%s509]
            %627 = vst [vmem:[%s517 + $0xd8] sm:%s509] %v626
            %v628 = vld [vmem:[%s516 + $0xdc] sm:%s509]
            %629 = vst [vmem:[%s517 + $0xdc] sm:%s509] %v628
            %v630 = vld [vmem:[%s516 + $0xe0] sm:%s509]
            %631 = vst [vmem:[%s517 + $0xe0] sm:%s509] %v630
            %v632 = vld [vmem:[%s516 + $0xe8] sm:%s509]
            %633 = vst [vmem:[%s517 + $0xe4] sm:%s509] %v632
            %v634 = vld [vmem:[%s516 + $0xe4] sm:%s509]
            %635 = vst [vmem:[%s517 + $0xe8] sm:%s509] %v634
            %v636 = vld [vmem:[%s516 + $0xec] sm:%s509]
            %637 = vst [vmem:[%s517 + $0xec] sm:%s509] %v636
            %v638 = vld [vmem:[%s516 + $0xf0] sm:%s509]
            %639 = vst [vmem:[%s517 + $0xf0] sm:%s509] %v638
            %v640 = vld [vmem:[%s516 + $0xf8] sm:%s509]
            %641 = vst [vmem:[%s517 + $0xf4] sm:%s509] %v640
            %v642 = vld [vmem:[%s516 + $0xf4] sm:%s509]
            %643 = vst [vmem:[%s517 + $0xf8] sm:%s509] %v642
            %v644 = vld [vmem:[%s516 + $0xfc] sm:%s509]
            %645 = vst [vmem:[%s517 + $0xfc] sm:%s509] %v644
          $region85: #{gnn_graphpred_forward.1} parent=79 // loop_footer
            %s515 = sadd.s32 1, %s511
          $region86: #{gnn_graphpred_forward.1} parent=79 // loop_footer_branch
            %510 = sbr.rel target = $region82
          $region87: #{gnn_graphpred_forward.1} parent=79 // loop_exit
            _
        $region80: #{gnn_graphpred_forward.1} parent=71 // pred_fallthru
          _
        // Predicated region
        $region106: #{gnn_graphpred_forward.1} parent=71 // pred_check
          _
        $region107: #{gnn_graphpred_forward.1} parent=71 // pred_check_branch
          %803 = sbr.rel (0) target = $region109
        $region108: #{gnn_graphpred_forward.1} parent=71 // pred_region
          %804 = vsyncadd [#allocation4], 4096
        $region109: #{gnn_graphpred_forward.1} parent=71 // pred_fallthru
          _
        %v805 = vld [vmem:[%s8] sm:$0xf]
        %v806 = vld [vmem:[%s8 + $0x4] sm:$0xf]
        %v807 = vld [vmem:[%s8 + $0x8] sm:$0xf]
        %v808 = vld [vmem:[%s8 + $0xc] sm:$0xf]
        %v809 = vld [vmem:[%s8 + $0x10] sm:$0xf]
        %v810 = vld [vmem:[%s8 + $0x14] sm:$0xf]
        %v811 = vld [vmem:[%s8 + $0x18] sm:$0xf]
        %v812 = vld [vmem:[%s8 + $0x1c] sm:$0xf]
        %v813 = vld [vmem:[%s8 + $0x20] sm:$0xf]
        %v814 = vld [vmem:[%s8 + $0x24] sm:$0xf]
        %v815 = vld [vmem:[%s8 + $0x28] sm:$0xf]
        %v816 = vld [vmem:[%s8 + $0x2c] sm:$0xf]
        %v817 = vld [vmem:[%s8 + $0x30] sm:$0xf]
        %v818 = vld [vmem:[%s8 + $0x34] sm:$0xf]
        %v819 = vld [vmem:[%s8 + $0x38] sm:$0xf]
        %v820 = vld [vmem:[%s8 + $0x3c] sm:$0xf]
        %v821 = vld [vmem:[%s8 + $0x40] sm:$0xf]
        %v822 = vld [vmem:[%s8 + $0x44] sm:$0xf]
        %v823 = vld [vmem:[%s8 + $0x48] sm:$0xf]
        %v824 = vld [vmem:[%s8 + $0x4c] sm:$0xf]
        %v825 = vld [vmem:[%s8 + $0x50] sm:$0xf]
        %v826 = vld [vmem:[%s8 + $0x54] sm:$0xf]
        %v827 = vld [vmem:[%s8 + $0x58] sm:$0xf]
        %v828 = vld [vmem:[%s8 + $0x5c] sm:$0xf]
        %v829 = vld [vmem:[%s8 + $0x60] sm:$0xf]
        %v830 = vld [vmem:[%s8 + $0x64] sm:$0xf]
        %v831 = vld [vmem:[%s8 + $0x68] sm:$0xf]
        %v832 = vld [vmem:[%s8 + $0x6c] sm:$0xf]
        %v833 = vld [vmem:[%s8 + $0x70] sm:$0xf]
        %v834 = vld [vmem:[%s8 + $0x74] sm:$0xf]
        %v835 = vld [vmem:[%s8 + $0x78] sm:$0xf]
        %v836 = vld [vmem:[%s8 + $0x7c] sm:$0xf]
        %v869 = vunpack.c.l.b16 %v805
        %v870 = vunpack.c.l.b16 %v806
        %v871 = vunpack.c.l.b16 %v807
        %v872 = vunpack.c.l.b16 %v808
        %v873 = vunpack.c.l.b16 %v809
        %v874 = vunpack.c.l.b16 %v810
        %v875 = vunpack.c.l.b16 %v811
        %v876 = vunpack.c.l.b16 %v812
        %v877 = vunpack.c.l.b16 %v813
        %v878 = vunpack.c.l.b16 %v814
        %v879 = vunpack.c.l.b16 %v815
        %v880 = vunpack.c.l.b16 %v816
        %v881 = vunpack.c.l.b16 %v817
        %v882 = vunpack.c.l.b16 %v818
        %v883 = vunpack.c.l.b16 %v819
        %v884 = vunpack.c.l.b16 %v820
        %v885 = vunpack.c.l.b16 %v821
        %v886 = vunpack.c.l.b16 %v822
        %v887 = vunpack.c.l.b16 %v823
        %v888 = vunpack.c.l.b16 %v824
        %v889 = vunpack.c.l.b16 %v825
        %v890 = vunpack.c.l.b16 %v826
        %v891 = vunpack.c.l.b16 %v827
        %v892 = vunpack.c.l.b16 %v828
        %v893 = vunpack.c.l.b16 %v829
        %v894 = vunpack.c.l.b16 %v830
        %v895 = vunpack.c.l.b16 %v831
        %v896 = vunpack.c.l.b16 %v832
        %v897 = vunpack.c.l.b16 %v833
        %v898 = vunpack.c.l.b16 %v834
        %v899 = vunpack.c.l.b16 %v835
        %v900 = vunpack.c.l.b16 %v836
        %v901 = vpack.c.b16 %v870, %v869
        %v902 = vpack.c.b16 %v872, %v871
        %v903 = vpack.c.b16 %v874, %v873
        %v904 = vpack.c.b16 %v876, %v875
        %v905 = vpack.c.b16 %v878, %v877
        %v906 = vpack.c.b16 %v880, %v879
        %v907 = vpack.c.b16 %v882, %v881
        %v908 = vpack.c.b16 %v884, %v883
        %v909 = vpack.c.b16 %v886, %v885
        %v910 = vpack.c.b16 %v888, %v887
        %v911 = vpack.c.b16 %v890, %v889
        %v912 = vpack.c.b16 %v892, %v891
        %v913 = vpack.c.b16 %v894, %v893
        %v914 = vpack.c.b16 %v896, %v895
        %v915 = vpack.c.b16 %v898, %v897
        %v916 = vpack.c.b16 %v900, %v899
        %933 = vst [vmem:[#allocation3] sm:$0xff] %v901
        %934 = vst [vmem:[#allocation3 + $0x8] sm:$0xff] %v902
        %935 = vst [vmem:[#allocation3 + $0x10] sm:$0xff] %v903
        %936 = vst [vmem:[#allocation3 + $0x18] sm:$0xff] %v904
        %937 = vst [vmem:[#allocation3 + $0x20] sm:$0xff] %v905
        %938 = vst [vmem:[#allocation3 + $0x28] sm:$0xff] %v906
        %939 = vst [vmem:[#allocation3 + $0x30] sm:$0xff] %v907
        %940 = vst [vmem:[#allocation3 + $0x38] sm:$0xff] %v908
        %941 = vst [vmem:[#allocation3 + $0x40] sm:$0xff] %v909
        %942 = vst [vmem:[#allocation3 + $0x48] sm:$0xff] %v910
        %943 = vst [vmem:[#allocation3 + $0x50] sm:$0xff] %v911
        %944 = vst [vmem:[#allocation3 + $0x58] sm:$0xff] %v912
        %945 = vst [vmem:[#allocation3 + $0x60] sm:$0xff] %v913
        %946 = vst [vmem:[#allocation3 + $0x68] sm:$0xff] %v914
        %947 = vst [vmem:[#allocation3 + $0x70] sm:$0xff] %v915
        %948 = vst [vmem:[#allocation3 + $0x78] sm:$0xff] %v916
        %s949 = smul.u32 4, 32
        %s950 = smul.u32 %s949, 2
        %s951 = sshll.u32 %s950, 4
        %952 = dma.done [#allocation4], %s951
      $region72: #{gnn_graphpred_forward.1} parent=67 // pred_fallthru
        _
      %v953 = vld [vmem:[%s473] sm:$0xff]
      %v954 = vld [vmem:[%s473 + $0x8] sm:$0xff]
      %v955 = vld [vmem:[%s473 + $0x10] sm:$0xff]
      %v956 = vld [vmem:[%s473 + $0x18] sm:$0xff]
      %v957 = vld [vmem:[%s473 + $0x20] sm:$0xff]
      %v958 = vld [vmem:[%s473 + $0x28] sm:$0xff]
      %v959 = vld [vmem:[%s473 + $0x30] sm:$0xff]
      %v960 = vld [vmem:[%s473 + $0x38] sm:$0xff]
      %v961 = vld [vmem:[%s473 + $0x40] sm:$0xff]
      %v962 = vld [vmem:[%s473 + $0x48] sm:$0xff]
      %v963 = vld [vmem:[%s473 + $0x50] sm:$0xff]
      %v964 = vld [vmem:[%s473 + $0x58] sm:$0xff]
      %v965 = vld [vmem:[%s473 + $0x60] sm:$0xff]
      %v966 = vld [vmem:[%s473 + $0x68] sm:$0xff]
      %v967 = vld [vmem:[%s473 + $0x70] sm:$0xff]
      %v968 = vld [vmem:[%s473 + $0x78] sm:$0xff]
      %v969 = vld [vmem:[%s473 + $0x80] sm:$0xff]
      %v970 = vld [vmem:[%s473 + $0x88] sm:$0xff]
      %v971 = vld [vmem:[%s473 + $0x90] sm:$0xff]
      %v972 = vld [vmem:[%s473 + $0x98] sm:$0xff]
      %v973 = vld [vmem:[%s473 + $0xa0] sm:$0xff]
      %v974 = vld [vmem:[%s473 + $0xa8] sm:$0xff]
      %v975 = vld [vmem:[%s473 + $0xb0] sm:$0xff]
      %v976 = vld [vmem:[%s473 + $0xb8] sm:$0xff]
      %v977 = vld [vmem:[%s473 + $0xc0] sm:$0xff]
      %v978 = vld [vmem:[%s473 + $0xc8] sm:$0xff]
      %v979 = vld [vmem:[%s473 + $0xd0] sm:$0xff]
      %v980 = vld [vmem:[%s473 + $0xd8] sm:$0xff]
      %v981 = vld [vmem:[%s473 + $0xe0] sm:$0xff]
      %v982 = vld [vmem:[%s473 + $0xe8] sm:$0xff]
      %v983 = vld [vmem:[%s473 + $0xf0] sm:$0xff]
      %v984 = vld [vmem:[%s473 + $0xf8] sm:$0xff]
      %v985 = vld [vmem:[#allocation2] sm:$0xff]
      %v986 = vld [vmem:[#allocation2 + $0x8] sm:$0xff]
      %v987 = vld [vmem:[#allocation2 + $0x10] sm:$0xff]
      %v988 = vld [vmem:[#allocation2 + $0x18] sm:$0xff]
      %v989 = vld [vmem:[#allocation2 + $0x20] sm:$0xff]
      %v990 = vld [vmem:[#allocation2 + $0x28] sm:$0xff]
      %v991 = vld [vmem:[#allocation2 + $0x30] sm:$0xff]
      %v992 = vld [vmem:[#allocation2 + $0x38] sm:$0xff]
      %v993 = vld [vmem:[#allocation2 + $0x40] sm:$0xff]
      %v994 = vld [vmem:[#allocation2 + $0x48] sm:$0xff]
      %v995 = vld [vmem:[#allocation2 + $0x50] sm:$0xff]
      %v996 = vld [vmem:[#allocation2 + $0x58] sm:$0xff]
      %v997 = vld [vmem:[#allocation2 + $0x60] sm:$0xff]
      %v998 = vld [vmem:[#allocation2 + $0x68] sm:$0xff]
      %v999 = vld [vmem:[#allocation2 + $0x70] sm:$0xff]
      %v1000 = vld [vmem:[#allocation2 + $0x78] sm:$0xff]
      %v1001 = vld [vmem:[#allocation2 + $0x80] sm:$0xff]
      %v1002 = vld [vmem:[#allocation2 + $0x88] sm:$0xff]
      %v1003 = vld [vmem:[#allocation2 + $0x90] sm:$0xff]
      %v1004 = vld [vmem:[#allocation2 + $0x98] sm:$0xff]
      %v1005 = vld [vmem:[#allocation2 + $0xa0] sm:$0xff]
      %v1006 = vld [vmem:[#allocation2 + $0xa8] sm:$0xff]
      %v1007 = vld [vmem:[#allocation2 + $0xb0] sm:$0xff]
      %v1008 = vld [vmem:[#allocation2 + $0xb8] sm:$0xff]
      %v1009 = vld [vmem:[#allocation2 + $0xc0] sm:$0xff]
      %v1010 = vld [vmem:[#allocation2 + $0xc8] sm:$0xff]
      %v1011 = vld [vmem:[#allocation2 + $0xd0] sm:$0xff]
      %v1012 = vld [vmem:[#allocation2 + $0xd8] sm:$0xff]
      %v1013 = vld [vmem:[#allocation2 + $0xe0] sm:$0xff]
      %v1014 = vld [vmem:[#allocation2 + $0xe8] sm:$0xff]
      %v1015 = vld [vmem:[#allocation2 + $0xf0] sm:$0xff]
      %v1016 = vld [vmem:[#allocation2 + $0xf8] sm:$0xff]
      %v1017 = vld [vmem:[#allocation3] sm:$0xff]
      %v1018 = vld [vmem:[#allocation3 + $0x8] sm:$0xff]
      %v1019 = vld [vmem:[#allocation3 + $0x10] sm:$0xff]
      %v1020 = vld [vmem:[#allocation3 + $0x18] sm:$0xff]
      %v1021 = vld [vmem:[#allocation3 + $0x20] sm:$0xff]
      %v1022 = vld [vmem:[#allocation3 + $0x28] sm:$0xff]
      %v1023 = vld [vmem:[#allocation3 + $0x30] sm:$0xff]
      %v1024 = vld [vmem:[#allocation3 + $0x38] sm:$0xff]
      %v1025 = vld [vmem:[#allocation3 + $0x40] sm:$0xff]
      %v1026 = vld [vmem:[#allocation3 + $0x48] sm:$0xff]
      %v1027 = vld [vmem:[#allocation3 + $0x50] sm:$0xff]
      %v1028 = vld [vmem:[#allocation3 + $0x58] sm:$0xff]
      %v1029 = vld [vmem:[#allocation3 + $0x60] sm:$0xff]
      %v1030 = vld [vmem:[#allocation3 + $0x68] sm:$0xff]
      %v1031 = vld [vmem:[#allocation3 + $0x70] sm:$0xff]
      %v1032 = vld [vmem:[#allocation3 + $0x78] sm:$0xff]
      %1033 = vmatprep.subr.bf16.mxu0 0
      %1034 = vmatpush1.bf16.msra.mxu0 %v1017
      %1035 = vmatprep.subr.bf16.mxu0 0
      %1036 = vmatpush1.bf16.msra.mxu0 %v1018
      %1037 = vmatprep.subr.bf16.mxu0 0
      %1038 = vmatpush1.bf16.msra.mxu0 %v1019
      %1039 = vmatprep.subr.bf16.mxu0 0
      %1040 = vmatpush1.bf16.msra.mxu0 %v1020
      %1041 = vmatprep.subr.bf16.mxu0 0
      %1042 = vmatpush1.bf16.msra.mxu0 %v1021
      %1043 = vmatprep.subr.bf16.mxu0 0
      %1044 = vmatpush1.bf16.msra.mxu0 %v1022
      %1045 = vmatprep.subr.bf16.mxu0 0
      %1046 = vmatpush1.bf16.msra.mxu0 %v1023
      %1047 = vmatprep.subr.bf16.mxu0 0
      %1048 = vmatpush1.bf16.msra.mxu0 %v1024
      %1049 = vmatprep.subr.bf16.mxu0 0
      %1050 = vmatpush1.bf16.msra.mxu0 %v1025
      %1051 = vmatprep.subr.bf16.mxu0 0
      %1052 = vmatpush1.bf16.msra.mxu0 %v1026
      %1053 = vmatprep.subr.bf16.mxu0 0
      %1054 = vmatpush1.bf16.msra.mxu0 %v1027
      %1055 = vmatprep.subr.bf16.mxu0 0
      %1056 = vmatpush1.bf16.msra.mxu0 %v1028
      %1057 = vmatprep.subr.bf16.mxu0 0
      %1058 = vmatpush1.bf16.msra.mxu0 %v1029
      %1059 = vmatprep.subr.bf16.mxu0 0
      %1060 = vmatpush1.bf16.msra.mxu0 %v1030
      %1061 = vmatprep.subr.bf16.mxu0 0
      %1062 = vmatpush1.bf16.msra.mxu0 %v1031
      %1063 = vmatprep.subr.bf16.mxu0 0
      %1064 = vmatpush1.bf16.msra.mxu0 %v1032
      %1065 = vmatprep.mubr.bf16.mxu0 %v986
      %1066 = vmatmul.mubr.bf16.gmra.mrb[0].mxu0 %v985
      %v1067 = vpop.f32.mrb[0].mxu0
      %v1068 = vadd.f32 0.0, %v1067
      %v1069 = vpop.f32.mrb[0].mxu0
      %v1070 = vpop.f32.mrb[0].mxu0
      %v1071 = vadd.f32 0.0, %v1070
      %v1072 = vpop.f32.mrb[0].mxu0
      %1073 = vmatprep.mubr.bf16.mxu0 %v988
      %1074 = vmatmul.mubr.bf16.gmra.mrb[0].mxu0 %v987
      %v1075 = vpop.f32.mrb[0].mxu0
      %v1076 = vadd.f32 0.0, %v1075
      %v1077 = vpop.f32.mrb[0].mxu0
      %v1078 = vpop.f32.mrb[0].mxu0
      %v1079 = vadd.f32 0.0, %v1078
      %v1080 = vpop.f32.mrb[0].mxu0
      %1081 = vmatprep.mubr.bf16.mxu0 %v990
      %1082 = vmatmul.mubr.bf16.gmra.mrb[0].mxu0 %v989
      %v1083 = vpop.f32.mrb[0].mxu0
      %v1084 = vadd.f32 0.0, %v1083
      %v1085 = vpop.f32.mrb[0].mxu0
      %v1086 = vpop.f32.mrb[0].mxu0
      %v1087 = vadd.f32 0.0, %v1086
      %v1088 = vpop.f32.mrb[0].mxu0
      %1089 = vmatprep.mubr.bf16.mxu0 %v992
      %1090 = vmatmul.mubr.bf16.gmra.mrb[0].mxu0 %v991
      %v1091 = vpop.f32.mrb[0].mxu0
      %v1092 = vadd.f32 0.0, %v1091
      %v1093 = vpop.f32.mrb[0].mxu0
      %v1094 = vpop.f32.mrb[0].mxu0
      %v1095 = vadd.f32 0.0, %v1094
      %v1096 = vpop.f32.mrb[0].mxu0
      %1097 = vmatprep.mubr.bf16.mxu0 %v994
      %1098 = vmatmul.mubr.bf16.gmra.mrb[0].mxu0 %v993
      %v1099 = vpop.f32.mrb[0].mxu0
      %v1100 = vadd.f32 0.0, %v1099
      %v1101 = vpop.f32.mrb[0].mxu0
      %v1102 = vpop.f32.mrb[0].mxu0
      %v1103 = vadd.f32 0.0, %v1102
      %v1104 = vpop.f32.mrb[0].mxu0
      %1105 = vmatprep.mubr.bf16.mxu0 %v996
      %1106 = vmatmul.mubr.bf16.gmra.mrb[0].mxu0 %v995
      %v1107 = vpop.f32.mrb[0].mxu0
      %v1108 = vadd.f32 0.0, %v1107
      %v1109 = vpop.f32.mrb[0].mxu0
      %v1110 = vpop.f32.mrb[0].mxu0
      %v1111 = vadd.f32 0.0, %v1110
      %v1112 = vpop.f32.mrb[0].mxu0
      %1113 = vmatprep.mubr.bf16.mxu0 %v998
      %1114 = vmatmul.mubr.bf16.gmra.mrb[0].mxu0 %v997
      %v1115 = vpop.f32.mrb[0].mxu0
      %v1116 = vadd.f32 0.0, %v1115
      %v1117 = vpop.f32.mrb[0].mxu0
      %v1118 = vpop.f32.mrb[0].mxu0
      %v1119 = vadd.f32 0.0, %v1118
      %v1120 = vpop.f32.mrb[0].mxu0
      %1121 = vmatprep.mubr.bf16.mxu0 %v1000
      %1122 = vmatmul.mubr.bf16.gmra.mrb[0].mxu0 %v999
      %v1123 = vpop.f32.mrb[0].mxu0
      %v1124 = vadd.f32 0.0, %v1123
      %v1125 = vpop.f32.mrb[0].mxu0
      %v1126 = vpop.f32.mrb[0].mxu0
      %v1127 = vadd.f32 0.0, %v1126
      %v1128 = vpop.f32.mrb[0].mxu0
      %1129 = vmatprep.mubr.bf16.mxu0 %v1002
      %1130 = vmatmul.mubr.bf16.gmra.mrb[0].mxu0 %v1001
      %v1131 = vpop.f32.mrb[0].mxu0
      %v1132 = vadd.f32 0.0, %v1131
      %v1133 = vpop.f32.mrb[0].mxu0
      %v1134 = vpop.f32.mrb[0].mxu0
      %v1135 = vadd.f32 0.0, %v1134
      %v1136 = vpop.f32.mrb[0].mxu0
      %1137 = vmatprep.mubr.bf16.mxu0 %v1004
      %1138 = vmatmul.mubr.bf16.gmra.mrb[0].mxu0 %v1003
      %v1139 = vpop.f32.mrb[0].mxu0
      %v1140 = vadd.f32 0.0, %v1139
      %v1141 = vpop.f32.mrb[0].mxu0
      %v1142 = vpop.f32.mrb[0].mxu0
      %v1143 = vadd.f32 0.0, %v1142
      %v1144 = vpop.f32.mrb[0].mxu0
      %1145 = vmatprep.mubr.bf16.mxu0 %v1006
      %1146 = vmatmul.mubr.bf16.gmra.mrb[0].mxu0 %v1005
      %v1147 = vpop.f32.mrb[0].mxu0
      %v1148 = vadd.f32 0.0, %v1147
      %v1149 = vpop.f32.mrb[0].mxu0
      %v1150 = vpop.f32.mrb[0].mxu0
      %v1151 = vadd.f32 0.0, %v1150
      %v1152 = vpop.f32.mrb[0].mxu0
      %1153 = vmatprep.mubr.bf16.mxu0 %v1008
      %1154 = vmatmul.mubr.bf16.gmra.mrb[0].mxu0 %v1007
      %v1155 = vpop.f32.mrb[0].mxu0
      %v1156 = vadd.f32 0.0, %v1155
      %v1157 = vpop.f32.mrb[0].mxu0
      %v1158 = vpop.f32.mrb[0].mxu0
      %v1159 = vadd.f32 0.0, %v1158
      %v1160 = vpop.f32.mrb[0].mxu0
      %1161 = vmatprep.mubr.bf16.mxu0 %v1010
      %1162 = vmatmul.mubr.bf16.gmra.mrb[0].mxu0 %v1009
      %v1163 = vpop.f32.mrb[0].mxu0
      %v1164 = vadd.f32 0.0, %v1163
      %v1165 = vpop.f32.mrb[0].mxu0
      %v1166 = vpop.f32.mrb[0].mxu0
      %v1167 = vadd.f32 0.0, %v1166
      %v1168 = vpop.f32.mrb[0].mxu0
      %1169 = vmatprep.mubr.bf16.mxu0 %v1012
      %1170 = vmatmul.mubr.bf16.gmra.mrb[0].mxu0 %v1011
      %v1171 = vpop.f32.mrb[0].mxu0
      %v1172 = vadd.f32 0.0, %v1171
      %v1173 = vpop.f32.mrb[0].mxu0
      %v1174 = vpop.f32.mrb[0].mxu0
      %v1175 = vadd.f32 0.0, %v1174
      %v1176 = vpop.f32.mrb[0].mxu0
      %1177 = vmatprep.mubr.bf16.mxu0 %v1014
      %1178 = vmatmul.mubr.bf16.gmra.mrb[0].mxu0 %v1013
      %v1179 = vpop.f32.mrb[0].mxu0
      %v1180 = vadd.f32 0.0, %v1179
      %v1181 = vpop.f32.mrb[0].mxu0
      %v1182 = vpop.f32.mrb[0].mxu0
      %v1183 = vadd.f32 0.0, %v1182
      %v1184 = vpop.f32.mrb[0].mxu0
      %1185 = vmatprep.mubr.bf16.mxu0 %v1016
      %1186 = vmatmul.mubr.bf16.gmra.mrb[0].mxu0 %v1015
      %v1187 = vpop.f32.mrb[0].mxu0
      %v1188 = vadd.f32 0.0, %v1187
      %v1189 = vpop.f32.mrb[0].mxu0
      %v1190 = vpop.f32.mrb[0].mxu0
      %v1191 = vadd.f32 0.0, %v1190
      %v1192 = vpop.f32.mrb[0].mxu0
      %1193 = vdwg.mxu0
      %v1194 = vadd.f32 %v953, %v1068
      %v1195 = vadd.f32 %v954, %v1071
      %v1196 = vadd.f32 %v955, %v1076
      %v1197 = vadd.f32 %v956, %v1079
      %v1198 = vadd.f32 %v957, %v1084
      %v1199 = vadd.f32 %v958, %v1087
      %v1200 = vadd.f32 %v959, %v1092
      %v1201 = vadd.f32 %v960, %v1095
      %v1202 = vadd.f32 %v961, %v1100
      %v1203 = vadd.f32 %v962, %v1103
      %v1204 = vadd.f32 %v963, %v1108
      %v1205 = vadd.f32 %v964, %v1111
      %v1206 = vadd.f32 %v965, %v1116
      %v1207 = vadd.f32 %v966, %v1119
      %v1208 = vadd.f32 %v967, %v1124
      %v1209 = vadd.f32 %v968, %v1127
      %v1210 = vadd.f32 %v969, %v1132
      %v1211 = vadd.f32 %v970, %v1135
      %v1212 = vadd.f32 %v971, %v1140
      %v1213 = vadd.f32 %v972, %v1143
      %v1214 = vadd.f32 %v973, %v1148
      %v1215 = vadd.f32 %v974, %v1151
      %v1216 = vadd.f32 %v975, %v1156
      %v1217 = vadd.f32 %v976, %v1159
      %v1218 = vadd.f32 %v977, %v1164
      %v1219 = vadd.f32 %v978, %v1167
      %v1220 = vadd.f32 %v979, %v1172
      %v1221 = vadd.f32 %v980, %v1175
      %v1222 = vadd.f32 %v981, %v1180
      %v1223 = vadd.f32 %v982, %v1183
      %v1224 = vadd.f32 %v983, %v1188
      %v1225 = vadd.f32 %v984, %v1191
      %v1226 = vpack.c.bf16 %v1195, %v1194
      %v1227 = vpack.c.bf16 %v1197, %v1196
      %v1228 = vpack.c.bf16 %v1199, %v1198
      %v1229 = vpack.c.bf16 %v1201, %v1200
      %v1230 = vpack.c.bf16 %v1203, %v1202
      %v1231 = vpack.c.bf16 %v1205, %v1204
      %v1232 = vpack.c.bf16 %v1207, %v1206
      %v1233 = vpack.c.bf16 %v1209, %v1208
      %v1234 = vpack.c.bf16 %v1211, %v1210
      %v1235 = vpack.c.bf16 %v1213, %v1212
      %v1236 = vpack.c.bf16 %v1215, %v1214
      %v1237 = vpack.c.bf16 %v1217, %v1216
      %v1238 = vpack.c.bf16 %v1219, %v1218
      %v1239 = vpack.c.bf16 %v1221, %v1220
      %v1240 = vpack.c.bf16 %v1223, %v1222
      %v1241 = vpack.c.bf16 %v1225, %v1224
      %v1242 = vld [vmem:[%s478] sm:$0xf]
      %v1243 = vld [vmem:[%s478 + $0x4] sm:$0xf]
      %v1244 = vld [vmem:[%s478 + $0x8] sm:$0xf]
      %v1245 = vld [vmem:[%s478 + $0xc] sm:$0xf]
      %v1246 = vld [vmem:[%s478 + $0x10] sm:$0xf]
      %v1247 = vld [vmem:[%s478 + $0x14] sm:$0xf]
      %v1248 = vld [vmem:[%s478 + $0x18] sm:$0xf]
      %v1249 = vld [vmem:[%s478 + $0x1c] sm:$0xf]
      %v1250 = vld [vmem:[%s478 + $0x20] sm:$0xf]
      %v1251 = vld [vmem:[%s478 + $0x24] sm:$0xf]
      %v1252 = vld [vmem:[%s478 + $0x28] sm:$0xf]
      %v1253 = vld [vmem:[%s478 + $0x2c] sm:$0xf]
      %v1254 = vld [vmem:[%s478 + $0x30] sm:$0xf]
      %v1255 = vld [vmem:[%s478 + $0x34] sm:$0xf]
      %v1256 = vld [vmem:[%s478 + $0x38] sm:$0xf]
      %v1257 = vld [vmem:[%s478 + $0x3c] sm:$0xf]
      %v1258 = vld [vmem:[%s481] sm:$0x1]
      %v1260 = vlaneseq
      %v1261 = vshrl.u32 %v1260, 7
      %v1262 = vsub.s32 0, %v1261
      %v1263 = vrot.slane %v1258, %v1262
      %v1281 = vunpack.c.l.b16 %v1242
      %v1282 = vunpack.c.l.b16 %v1243
      %v1283 = vunpack.c.l.b16 %v1244
      %v1284 = vunpack.c.l.b16 %v1245
      %v1285 = vunpack.c.l.b16 %v1246
      %v1286 = vunpack.c.l.b16 %v1247
      %v1287 = vunpack.c.l.b16 %v1248
      %v1288 = vunpack.c.l.b16 %v1249
      %v1289 = vunpack.c.l.b16 %v1250
      %v1290 = vunpack.c.l.b16 %v1251
      %v1291 = vunpack.c.l.b16 %v1252
      %v1292 = vunpack.c.l.b16 %v1253
      %v1293 = vunpack.c.l.b16 %v1254
      %v1294 = vunpack.c.l.b16 %v1255
      %v1295 = vunpack.c.l.b16 %v1256
      %v1296 = vunpack.c.l.b16 %v1257
      %v1297 = vpack.c.b16 %v1282, %v1281
      %v1298 = vpack.c.b16 %v1284, %v1283
      %v1299 = vpack.c.b16 %v1286, %v1285
      %v1300 = vpack.c.b16 %v1288, %v1287
      %v1301 = vpack.c.b16 %v1290, %v1289
      %v1302 = vpack.c.b16 %v1292, %v1291
      %v1303 = vpack.c.b16 %v1294, %v1293
      %v1304 = vpack.c.b16 %v1296, %v1295
      %1313 = vmatprep.subr.bf16.mxu0 0
      %1314 = vmatpush1.bf16.msra.mxu0 %v1297
      %1315 = vmatprep.subr.bf16.mxu0 0
      %1316 = vmatpush1.bf16.msra.mxu0 %v1298
      %1317 = vmatprep.subr.bf16.mxu0 0
      %1318 = vmatpush1.bf16.msra.mxu0 %v1299
      %1319 = vmatprep.subr.bf16.mxu0 0
      %1320 = vmatpush1.bf16.msra.mxu0 %v1300
      %1321 = vmatprep.subr.bf16.mxu0 0
      %1322 = vmatpush1.bf16.msra.mxu0 %v1301
      %1323 = vmatprep.subr.bf16.mxu0 0
      %1324 = vmatpush1.bf16.msra.mxu0 %v1302
      %1325 = vmatprep.subr.bf16.mxu0 0
      %1326 = vmatpush1.bf16.msra.mxu0 %v1303
      %1327 = vmatprep.subr.bf16.mxu0 0
      %1328 = vmatpush1.bf16.msra.mxu0 %v1304
      %1329 = vmatprep.subr.bf16.mxu0 0
      %1330 = vmatpush1.bf16.msra.mxu0 0
      %1331 = vmatprep.subr.bf16.mxu0 0
      %1332 = vmatpush1.bf16.msra.mxu0 0
      %1333 = vmatprep.subr.bf16.mxu0 0
      %1334 = vmatpush1.bf16.msra.mxu0 0
      %1335 = vmatprep.subr.bf16.mxu0 0
      %1336 = vmatpush1.bf16.msra.mxu0 0
      %1337 = vmatprep.subr.bf16.mxu0 0
      %1338 = vmatpush1.bf16.msra.mxu0 0
      %1339 = vmatprep.subr.bf16.mxu0 0
      %1340 = vmatpush1.bf16.msra.mxu0 0
      %1341 = vmatprep.subr.bf16.mxu0 0
      %1342 = vmatpush1.bf16.msra.mxu0 0
      %1343 = vmatprep.subr.bf16.mxu0 0
      %1344 = vmatpush1.bf16.msra.mxu0 0
      %1345 = vmatprep.mubr.bf16.mxu0 0
      %1346 = vmatmul.mubr.bf16.gmra.mrb[0].mxu0 %v1226
      %v1347 = vpop.f32.mrb[0].mxu0
      %v1348 = vadd.f32 %v1263, %v1347
      %v1349 = vpop.f32.mrb[0].mxu0
      %v1350 = vpop.f32.mrb[0].mxu0
      %v1351 = vadd.f32 %v1263, %v1350
      %v1352 = vpop.f32.mrb[0].mxu0
      %1353 = vmatprep.mubr.bf16.mxu0 0
      %1354 = vmatmul.mubr.bf16.gmra.mrb[0].mxu0 %v1227
      %v1355 = vpop.f32.mrb[0].mxu0
      %v1356 = vadd.f32 %v1263, %v1355
      %v1357 = vpop.f32.mrb[0].mxu0
      %v1358 = vpop.f32.mrb[0].mxu0
      %v1359 = vadd.f32 %v1263, %v1358
      %v1360 = vpop.f32.mrb[0].mxu0
      %1361 = vmatprep.mubr.bf16.mxu0 0
      %1362 = vmatmul.mubr.bf16.gmra.mrb[0].mxu0 %v1228
      %v1363 = vpop.f32.mrb[0].mxu0
      %v1364 = vadd.f32 %v1263, %v1363
      %v1365 = vpop.f32.mrb[0].mxu0
      %v1366 = vpop.f32.mrb[0].mxu0
      %v1367 = vadd.f32 %v1263, %v1366
      %v1368 = vpop.f32.mrb[0].mxu0
      %1369 = vmatprep.mubr.bf16.mxu0 0
      %1370 = vmatmul.mubr.bf16.gmra.mrb[0].mxu0 %v1229
      %v1371 = vpop.f32.mrb[0].mxu0
      %v1372 = vadd.f32 %v1263, %v1371
      %v1373 = vpop.f32.mrb[0].mxu0
      %v1374 = vpop.f32.mrb[0].mxu0
      %v1375 = vadd.f32 %v1263, %v1374
      %v1376 = vpop.f32.mrb[0].mxu0
      %1377 = vmatprep.mubr.bf16.mxu0 0
      %1378 = vmatmul.mubr.bf16.gmra.mrb[0].mxu0 %v1230
      %v1379 = vpop.f32.mrb[0].mxu0
      %v1380 = vadd.f32 %v1263, %v1379
      %v1381 = vpop.f32.mrb[0].mxu0
      %v1382 = vpop.f32.mrb[0].mxu0
      %v1383 = vadd.f32 %v1263, %v1382
      %v1384 = vpop.f32.mrb[0].mxu0
      %1385 = vmatprep.mubr.bf16.mxu0 0
      %1386 = vmatmul.mubr.bf16.gmra.mrb[0].mxu0 %v1231
      %v1387 = vpop.f32.mrb[0].mxu0
      %v1388 = vadd.f32 %v1263, %v1387
      %v1389 = vpop.f32.mrb[0].mxu0
      %v1390 = vpop.f32.mrb[0].mxu0
      %v1391 = vadd.f32 %v1263, %v1390
      %v1392 = vpop.f32.mrb[0].mxu0
      %1393 = vmatprep.mubr.bf16.mxu0 0
      %1394 = vmatmul.mubr.bf16.gmra.mrb[0].mxu0 %v1232
      %v1395 = vpop.f32.mrb[0].mxu0
      %v1396 = vadd.f32 %v1263, %v1395
      %v1397 = vpop.f32.mrb[0].mxu0
      %v1398 = vpop.f32.mrb[0].mxu0
      %v1399 = vadd.f32 %v1263, %v1398
      %v1400 = vpop.f32.mrb[0].mxu0
      %1401 = vmatprep.mubr.bf16.mxu0 0
      %1402 = vmatmul.mubr.bf16.gmra.mrb[0].mxu0 %v1233
      %v1403 = vpop.f32.mrb[0].mxu0
      %v1404 = vadd.f32 %v1263, %v1403
      %v1405 = vpop.f32.mrb[0].mxu0
      %v1406 = vpop.f32.mrb[0].mxu0
      %v1407 = vadd.f32 %v1263, %v1406
      %v1408 = vpop.f32.mrb[0].mxu0
      %1409 = vmatprep.mubr.bf16.mxu0 0
      %1410 = vmatmul.mubr.bf16.gmra.mrb[0].mxu0 %v1234
      %v1411 = vpop.f32.mrb[0].mxu0
      %v1412 = vadd.f32 %v1263, %v1411
      %v1413 = vpop.f32.mrb[0].mxu0
      %v1414 = vpop.f32.mrb[0].mxu0
      %v1415 = vadd.f32 %v1263, %v1414
      %v1416 = vpop.f32.mrb[0].mxu0
      %1417 = vmatprep.mubr.bf16.mxu0 0
      %1418 = vmatmul.mubr.bf16.gmra.mrb[0].mxu0 %v1235
      %v1419 = vpop.f32.mrb[0].mxu0
      %v1420 = vadd.f32 %v1263, %v1419
      %v1421 = vpop.f32.mrb[0].mxu0
      %v1422 = vpop.f32.mrb[0].mxu0
      %v1423 = vadd.f32 %v1263, %v1422
      %v1424 = vpop.f32.mrb[0].mxu0
      %1425 = vmatprep.mubr.bf16.mxu0 0
      %1426 = vmatmul.mubr.bf16.gmra.mrb[0].mxu0 %v1236
      %v1427 = vpop.f32.mrb[0].mxu0
      %v1428 = vadd.f32 %v1263, %v1427
      %v1429 = vpop.f32.mrb[0].mxu0
      %v1430 = vpop.f32.mrb[0].mxu0
      %v1431 = vadd.f32 %v1263, %v1430
      %v1432 = vpop.f32.mrb[0].mxu0
      %1433 = vmatprep.mubr.bf16.mxu0 0
      %1434 = vmatmul.mubr.bf16.gmra.mrb[0].mxu0 %v1237
      %v1435 = vpop.f32.mrb[0].mxu0
      %v1436 = vadd.f32 %v1263, %v1435
      %v1437 = vpop.f32.mrb[0].mxu0
      %v1438 = vpop.f32.mrb[0].mxu0
      %v1439 = vadd.f32 %v1263, %v1438
      %v1440 = vpop.f32.mrb[0].mxu0
      %1441 = vmatprep.mubr.bf16.mxu0 0
      %1442 = vmatmul.mubr.bf16.gmra.mrb[0].mxu0 %v1238
      %v1443 = vpop.f32.mrb[0].mxu0
      %v1444 = vadd.f32 %v1263, %v1443
      %v1445 = vpop.f32.mrb[0].mxu0
      %v1446 = vpop.f32.mrb[0].mxu0
      %v1447 = vadd.f32 %v1263, %v1446
      %v1448 = vpop.f32.mrb[0].mxu0
      %1449 = vmatprep.mubr.bf16.mxu0 0
      %1450 = vmatmul.mubr.bf16.gmra.mrb[0].mxu0 %v1239
      %v1451 = vpop.f32.mrb[0].mxu0
      %v1452 = vadd.f32 %v1263, %v1451
      %v1453 = vpop.f32.mrb[0].mxu0
      %v1454 = vpop.f32.mrb[0].mxu0
      %v1455 = vadd.f32 %v1263, %v1454
      %v1456 = vpop.f32.mrb[0].mxu0
      %1457 = vmatprep.mubr.bf16.mxu0 0
      %1458 = vmatmul.mubr.bf16.gmra.mrb[0].mxu0 %v1240
      %v1459 = vpop.f32.mrb[0].mxu0
      %v1460 = vadd.f32 %v1263, %v1459
      %v1461 = vpop.f32.mrb[0].mxu0
      %v1462 = vpop.f32.mrb[0].mxu0
      %v1463 = vadd.f32 %v1263, %v1462
      %v1464 = vpop.f32.mrb[0].mxu0
      %1465 = vmatprep.mubr.bf16.mxu0 0
      %1466 = vmatmul.mubr.bf16.gmra.mrb[0].mxu0 %v1241
      %v1467 = vpop.f32.mrb[0].mxu0
      %v1468 = vadd.f32 %v1263, %v1467
      %v1469 = vpop.f32.mrb[0].mxu0
      %v1470 = vpop.f32.mrb[0].mxu0
      %v1471 = vadd.f32 %v1263, %v1470
      %v1472 = vpop.f32.mrb[0].mxu0
      %1473 = vdwg.mxu0
      %v1474 = vmax.f32 %v1348, 0.0
      %v1475 = vmax.f32 %v1351, 0.0
      %v1476 = vmax.f32 %v1356, 0.0
      %v1477 = vmax.f32 %v1359, 0.0
      %v1478 = vmax.f32 %v1364, 0.0
      %v1479 = vmax.f32 %v1367, 0.0
      %v1480 = vmax.f32 %v1372, 0.0
      %v1481 = vmax.f32 %v1375, 0.0
      %v1482 = vmax.f32 %v1380, 0.0
      %v1483 = vmax.f32 %v1383, 0.0
      %v1484 = vmax.f32 %v1388, 0.0
      %v1485 = vmax.f32 %v1391, 0.0
      %v1486 = vmax.f32 %v1396, 0.0
      %v1487 = vmax.f32 %v1399, 0.0
      %v1488 = vmax.f32 %v1404, 0.0
      %v1489 = vmax.f32 %v1407, 0.0
      %v1490 = vmax.f32 %v1412, 0.0
      %v1491 = vmax.f32 %v1415, 0.0
      %v1492 = vmax.f32 %v1420, 0.0
      %v1493 = vmax.f32 %v1423, 0.0
      %v1494 = vmax.f32 %v1428, 0.0
      %v1495 = vmax.f32 %v1431, 0.0
      %v1496 = vmax.f32 %v1436, 0.0
      %v1497 = vmax.f32 %v1439, 0.0
      %v1498 = vmax.f32 %v1444, 0.0
      %v1499 = vmax.f32 %v1447, 0.0
      %v1500 = vmax.f32 %v1452, 0.0
      %v1501 = vmax.f32 %v1455, 0.0
      %v1502 = vmax.f32 %v1460, 0.0
      %v1503 = vmax.f32 %v1463, 0.0
      %v1504 = vmax.f32 %v1468, 0.0
      %v1505 = vmax.f32 %v1471, 0.0
      %v1506 = vpack.c.bf16 %v1475, %v1474
      %v1507 = vpack.c.bf16 %v1477, %v1476
      %v1508 = vpack.c.bf16 %v1479, %v1478
      %v1509 = vpack.c.bf16 %v1481, %v1480
      %v1510 = vpack.c.bf16 %v1483, %v1482
      %v1511 = vpack.c.bf16 %v1485, %v1484
      %v1512 = vpack.c.bf16 %v1487, %v1486
      %v1513 = vpack.c.bf16 %v1489, %v1488
      %v1514 = vpack.c.bf16 %v1491, %v1490
      %v1515 = vpack.c.bf16 %v1493, %v1492
      %v1516 = vpack.c.bf16 %v1495, %v1494
      %v1517 = vpack.c.bf16 %v1497, %v1496
      %v1518 = vpack.c.bf16 %v1499, %v1498
      %v1519 = vpack.c.bf16 %v1501, %v1500
      %v1520 = vpack.c.bf16 %v1503, %v1502
      %v1521 = vpack.c.bf16 %v1505, %v1504
      %v1522 = vld [vmem:[%s486] sm:$0xf]
      %v1523 = vld [vmem:[%s486 + $0x4] sm:$0xf]
      %v1524 = vld [vmem:[%s486 + $0x8] sm:$0xf]
      %v1525 = vld [vmem:[%s486 + $0xc] sm:$0xf]
      %v1526 = vld [vmem:[%s486 + $0x10] sm:$0xf]
      %v1527 = vld [vmem:[%s486 + $0x14] sm:$0xf]
      %v1528 = vld [vmem:[%s486 + $0x18] sm:$0xf]
      %v1529 = vld [vmem:[%s486 + $0x1c] sm:$0xf]
      %v1530 = vld [vmem:[%s486 + $0x20] sm:$0xf]
      %v1531 = vld [vmem:[%s486 + $0x24] sm:$0xf]
      %v1532 = vld [vmem:[%s486 + $0x28] sm:$0xf]
      %v1533 = vld [vmem:[%s486 + $0x2c] sm:$0xf]
      %v1534 = vld [vmem:[%s486 + $0x30] sm:$0xf]
      %v1535 = vld [vmem:[%s486 + $0x34] sm:$0xf]
      %v1536 = vld [vmem:[%s486 + $0x38] sm:$0xf]
      %v1537 = vld [vmem:[%s486 + $0x3c] sm:$0xf]
      %v1538 = vld [vmem:[%s489] sm:$0x1]
      %v1540 = vlaneseq
      %v1541 = vshrl.u32 %v1540, 7
      %v1542 = vsub.s32 0, %v1541
      %v1543 = vrot.slane %v1538, %v1542
      %v1561 = vunpack.c.l.b16 %v1522
      %v1562 = vunpack.c.l.b16 %v1523
      %v1563 = vunpack.c.l.b16 %v1524
      %v1564 = vunpack.c.l.b16 %v1525
      %v1565 = vunpack.c.l.b16 %v1526
      %v1566 = vunpack.c.l.b16 %v1527
      %v1567 = vunpack.c.l.b16 %v1528
      %v1568 = vunpack.c.l.b16 %v1529
      %v1569 = vunpack.c.l.b16 %v1530
      %v1570 = vunpack.c.l.b16 %v1531
      %v1571 = vunpack.c.l.b16 %v1532
      %v1572 = vunpack.c.l.b16 %v1533
      %v1573 = vunpack.c.l.b16 %v1534
      %v1574 = vunpack.c.l.b16 %v1535
      %v1575 = vunpack.c.l.b16 %v1536
      %v1576 = vunpack.c.l.b16 %v1537
      %v1577 = vpack.c.b16 %v1562, %v1561
      %v1578 = vpack.c.b16 %v1564, %v1563
      %v1579 = vpack.c.b16 %v1566, %v1565
      %v1580 = vpack.c.b16 %v1568, %v1567
      %v1581 = vpack.c.b16 %v1570, %v1569
      %v1582 = vpack.c.b16 %v1572, %v1571
      %v1583 = vpack.c.b16 %v1574, %v1573
      %v1584 = vpack.c.b16 %v1576, %v1575
      %1593 = vmatprep.subr.bf16.mxu0 0
      %1594 = vmatpush1.bf16.msra.mxu0 %v1577
      %1595 = vmatprep.subr.bf16.mxu0 0
      %1596 = vmatpush1.bf16.msra.mxu0 %v1578
      %1597 = vmatprep.subr.bf16.mxu0 0
      %1598 = vmatpush1.bf16.msra.mxu0 %v1579
      %1599 = vmatprep.subr.bf16.mxu0 0
      %1600 = vmatpush1.bf16.msra.mxu0 %v1580
      %1601 = vmatprep.subr.bf16.mxu0 0
      %1602 = vmatpush1.bf16.msra.mxu0 %v1581
      %1603 = vmatprep.subr.bf16.mxu0 0
      %1604 = vmatpush1.bf16.msra.mxu0 %v1582
      %1605 = vmatprep.subr.bf16.mxu0 0
      %1606 = vmatpush1.bf16.msra.mxu0 %v1583
      %1607 = vmatprep.subr.bf16.mxu0 0
      %1608 = vmatpush1.bf16.msra.mxu0 %v1584
      %1609 = vmatprep.subr.bf16.mxu0 0
      %1610 = vmatpush1.bf16.msra.mxu0 0
      %1611 = vmatprep.subr.bf16.mxu0 0
      %1612 = vmatpush1.bf16.msra.mxu0 0
      %1613 = vmatprep.subr.bf16.mxu0 0
      %1614 = vmatpush1.bf16.msra.mxu0 0
      %1615 = vmatprep.subr.bf16.mxu0 0
      %1616 = vmatpush1.bf16.msra.mxu0 0
      %1617 = vmatprep.subr.bf16.mxu0 0
      %1618 = vmatpush1.bf16.msra.mxu0 0
      %1619 = vmatprep.subr.bf16.mxu0 0
      %1620 = vmatpush1.bf16.msra.mxu0 0
      %1621 = vmatprep.subr.bf16.mxu0 0
      %1622 = vmatpush1.bf16.msra.mxu0 0
      %1623 = vmatprep.subr.bf16.mxu0 0
      %1624 = vmatpush1.bf16.msra.mxu0 0
      %1625 = vmatprep.mubr.bf16.mxu0 0
      %1626 = vmatmul.mubr.bf16.gmra.mrb[0].mxu0 %v1506
      %v1627 = vpop.f32.mrb[0].mxu0
      %v1628 = vadd.f32 %v1543, %v1627
      %v1629 = vpop.f32.mrb[0].mxu0
      %v1630 = vpop.f32.mrb[0].mxu0
      %v1631 = vadd.f32 %v1543, %v1630
      %v1632 = vpop.f32.mrb[0].mxu0
      %1633 = vmatprep.mubr.bf16.mxu0 0
      %1634 = vmatmul.mubr.bf16.gmra.mrb[0].mxu0 %v1507
      %v1635 = vpop.f32.mrb[0].mxu0
      %v1636 = vadd.f32 %v1543, %v1635
      %v1637 = vpop.f32.mrb[0].mxu0
      %v1638 = vpop.f32.mrb[0].mxu0
      %v1639 = vadd.f32 %v1543, %v1638
      %v1640 = vpop.f32.mrb[0].mxu0
      %1641 = vmatprep.mubr.bf16.mxu0 0
      %1642 = vmatmul.mubr.bf16.gmra.mrb[0].mxu0 %v1508
      %v1643 = vpop.f32.mrb[0].mxu0
      %v1644 = vadd.f32 %v1543, %v1643
      %v1645 = vpop.f32.mrb[0].mxu0
      %v1646 = vpop.f32.mrb[0].mxu0
      %v1647 = vadd.f32 %v1543, %v1646
      %v1648 = vpop.f32.mrb[0].mxu0
      %1649 = vmatprep.mubr.bf16.mxu0 0
      %1650 = vmatmul.mubr.bf16.gmra.mrb[0].mxu0 %v1509
      %v1651 = vpop.f32.mrb[0].mxu0
      %v1652 = vadd.f32 %v1543, %v1651
      %v1653 = vpop.f32.mrb[0].mxu0
      %v1654 = vpop.f32.mrb[0].mxu0
      %v1655 = vadd.f32 %v1543, %v1654
      %v1656 = vpop.f32.mrb[0].mxu0
      %1657 = vmatprep.mubr.bf16.mxu0 0
      %1658 = vmatmul.mubr.bf16.gmra.mrb[0].mxu0 %v1510
      %v1659 = vpop.f32.mrb[0].mxu0
      %v1660 = vadd.f32 %v1543, %v1659
      %v1661 = vpop.f32.mrb[0].mxu0
      %v1662 = vpop.f32.mrb[0].mxu0
      %v1663 = vadd.f32 %v1543, %v1662
      %v1664 = vpop.f32.mrb[0].mxu0
      %1665 = vmatprep.mubr.bf16.mxu0 0
      %1666 = vmatmul.mubr.bf16.gmra.mrb[0].mxu0 %v1511
      %v1667 = vpop.f32.mrb[0].mxu0
      %v1668 = vadd.f32 %v1543, %v1667
      %v1669 = vpop.f32.mrb[0].mxu0
      %v1670 = vpop.f32.mrb[0].mxu0
      %v1671 = vadd.f32 %v1543, %v1670
      %v1672 = vpop.f32.mrb[0].mxu0
      %1673 = vmatprep.mubr.bf16.mxu0 0
      %1674 = vmatmul.mubr.bf16.gmra.mrb[0].mxu0 %v1512
      %v1675 = vpop.f32.mrb[0].mxu0
      %v1676 = vadd.f32 %v1543, %v1675
      %v1677 = vpop.f32.mrb[0].mxu0
      %v1678 = vpop.f32.mrb[0].mxu0
      %v1679 = vadd.f32 %v1543, %v1678
      %v1680 = vpop.f32.mrb[0].mxu0
      %1681 = vmatprep.mubr.bf16.mxu0 0
      %1682 = vmatmul.mubr.bf16.gmra.mrb[0].mxu0 %v1513
      %v1683 = vpop.f32.mrb[0].mxu0
      %v1684 = vadd.f32 %v1543, %v1683
      %v1685 = vpop.f32.mrb[0].mxu0
      %v1686 = vpop.f32.mrb[0].mxu0
      %v1687 = vadd.f32 %v1543, %v1686
      %v1688 = vpop.f32.mrb[0].mxu0
      %1689 = vmatprep.mubr.bf16.mxu0 0
      %1690 = vmatmul.mubr.bf16.gmra.mrb[0].mxu0 %v1514
      %v1691 = vpop.f32.mrb[0].mxu0
      %v1692 = vadd.f32 %v1543, %v1691
      %v1693 = vpop.f32.mrb[0].mxu0
      %v1694 = vpop.f32.mrb[0].mxu0
      %v1695 = vadd.f32 %v1543, %v1694
      %v1696 = vpop.f32.mrb[0].mxu0
      %1697 = vmatprep.mubr.bf16.mxu0 0
      %1698 = vmatmul.mubr.bf16.gmra.mrb[0].mxu0 %v1515
      %v1699 = vpop.f32.mrb[0].mxu0
      %v1700 = vadd.f32 %v1543, %v1699
      %v1701 = vpop.f32.mrb[0].mxu0
      %v1702 = vpop.f32.mrb[0].mxu0
      %v1703 = vadd.f32 %v1543, %v1702
      %v1704 = vpop.f32.mrb[0].mxu0
      %1705 = vmatprep.mubr.bf16.mxu0 0
      %1706 = vmatmul.mubr.bf16.gmra.mrb[0].mxu0 %v1516
      %v1707 = vpop.f32.mrb[0].mxu0
      %v1708 = vadd.f32 %v1543, %v1707
      %v1709 = vpop.f32.mrb[0].mxu0
      %v1710 = vpop.f32.mrb[0].mxu0
      %v1711 = vadd.f32 %v1543, %v1710
      %v1712 = vpop.f32.mrb[0].mxu0
      %1713 = vmatprep.mubr.bf16.mxu0 0
      %1714 = vmatmul.mubr.bf16.gmra.mrb[0].mxu0 %v1517
      %v1715 = vpop.f32.mrb[0].mxu0
      %v1716 = vadd.f32 %v1543, %v1715
      %v1717 = vpop.f32.mrb[0].mxu0
      %v1718 = vpop.f32.mrb[0].mxu0
      %v1719 = vadd.f32 %v1543, %v1718
      %v1720 = vpop.f32.mrb[0].mxu0
      %1721 = vmatprep.mubr.bf16.mxu0 0
      %1722 = vmatmul.mubr.bf16.gmra.mrb[0].mxu0 %v1518
      %v1723 = vpop.f32.mrb[0].mxu0
      %v1724 = vadd.f32 %v1543, %v1723
      %v1725 = vpop.f32.mrb[0].mxu0
      %v1726 = vpop.f32.mrb[0].mxu0
      %v1727 = vadd.f32 %v1543, %v1726
      %v1728 = vpop.f32.mrb[0].mxu0
      %1729 = vmatprep.mubr.bf16.mxu0 0
      %1730 = vmatmul.mubr.bf16.gmra.mrb[0].mxu0 %v1519
      %v1731 = vpop.f32.mrb[0].mxu0
      %v1732 = vadd.f32 %v1543, %v1731
      %v1733 = vpop.f32.mrb[0].mxu0
      %v1734 = vpop.f32.mrb[0].mxu0
      %v1735 = vadd.f32 %v1543, %v1734
      %v1736 = vpop.f32.mrb[0].mxu0
      %1737 = vmatprep.mubr.bf16.mxu0 0
      %1738 = vmatmul.mubr.bf16.gmra.mrb[0].mxu0 %v1520
      %v1739 = vpop.f32.mrb[0].mxu0
      %v1740 = vadd.f32 %v1543, %v1739
      %v1741 = vpop.f32.mrb[0].mxu0
      %v1742 = vpop.f32.mrb[0].mxu0
      %v1743 = vadd.f32 %v1543, %v1742
      %v1744 = vpop.f32.mrb[0].mxu0
      %1745 = vmatprep.mubr.bf16.mxu0 0
      %1746 = vmatmul.mubr.bf16.gmra.mrb[0].mxu0 %v1521
      %v1747 = vpop.f32.mrb[0].mxu0
      %v1748 = vadd.f32 %v1543, %v1747
      %v1749 = vpop.f32.mrb[0].mxu0
      %v1750 = vpop.f32.mrb[0].mxu0
      %v1751 = vadd.f32 %v1543, %v1750
      %v1752 = vpop.f32.mrb[0].mxu0
      %1753 = vdwg.mxu0
      %v1754 = vlaneseq
      %v1755 = vshrl.u32 %v1754, 7
      %v1756 = vadd.s32 %v1755, 8
      %v1757 = vadd.s32 %v1755, 16
      %v1758 = vadd.s32 %v1755, 24
      %v1759 = vadd.s32 %v1755, 32
      %v1760 = vadd.s32 %v1755, 40
      %v1761 = vadd.s32 %v1755, 48
      %v1762 = vadd.s32 %v1755, 56
      %v1763 = vadd.s32 %v1755, 64
      %v1764 = vadd.s32 %v1755, 72
      %v1765 = vadd.s32 %v1755, 80
      %v1766 = vadd.s32 %v1755, 88
      %v1767 = vadd.s32 %v1755, 96
      %v1768 = vadd.s32 %v1755, 104
      %v1769 = vadd.s32 %v1755, 112
      %v1770 = vadd.s32 %v1755, 120
      %v1771 = vadd.s32 %v1755, 128
      %v1772 = vadd.s32 %v1755, 136
      %v1773 = vadd.s32 %v1755, 144
      %v1774 = vadd.s32 %v1755, 152
      %v1775 = vadd.s32 %v1755, 160
      %v1776 = vadd.s32 %v1755, 168
      %v1777 = vadd.s32 %v1755, 176
      %v1778 = vadd.s32 %v1755, 184
      %v1779 = vadd.s32 %v1755, 192
      %v1780 = vadd.s32 %v1755, 200
      %v1781 = vadd.s32 %v1755, 208
      %v1782 = vadd.s32 %v1755, 216
      %v1783 = vadd.s32 %v1755, 224
      %v1784 = vadd.s32 %v1755, 232
      %v1785 = vadd.s32 %v1755, 240
      %v1786 = vadd.s32 %v1755, 248
      %vm1787 = vcmp.lt.s32.totalorder %v1755, 200
      %vm1788 = vcmp.lt.s32.totalorder %v1756, 200
      %vm1789 = vcmp.lt.s32.totalorder %v1757, 200
      %vm1790 = vcmp.lt.s32.totalorder %v1758, 200
      %vm1791 = vcmp.lt.s32.totalorder %v1759, 200
      %vm1792 = vcmp.lt.s32.totalorder %v1760, 200
      %vm1793 = vcmp.lt.s32.totalorder %v1761, 200
      %vm1794 = vcmp.lt.s32.totalorder %v1762, 200
      %vm1795 = vcmp.lt.s32.totalorder %v1763, 200
      %vm1796 = vcmp.lt.s32.totalorder %v1764, 200
      %vm1797 = vcmp.lt.s32.totalorder %v1765, 200
      %vm1798 = vcmp.lt.s32.totalorder %v1766, 200
      %vm1799 = vcmp.lt.s32.totalorder %v1767, 200
      %vm1800 = vcmp.lt.s32.totalorder %v1768, 200
      %vm1801 = vcmp.lt.s32.totalorder %v1769, 200
      %vm1802 = vcmp.lt.s32.totalorder %v1770, 200
      %vm1803 = vcmp.lt.s32.totalorder %v1771, 200
      %vm1804 = vcmp.lt.s32.totalorder %v1772, 200
      %vm1805 = vcmp.lt.s32.totalorder %v1773, 200
      %vm1806 = vcmp.lt.s32.totalorder %v1774, 200
      %vm1807 = vcmp.lt.s32.totalorder %v1775, 200
      %vm1808 = vcmp.lt.s32.totalorder %v1776, 200
      %vm1809 = vcmp.lt.s32.totalorder %v1777, 200
      %vm1810 = vcmp.lt.s32.totalorder %v1778, 200
      %vm1811 = vcmp.lt.s32.totalorder %v1779, 200
      %vm1812 = vcmp.lt.s32.totalorder %v1780, 200
      %vm1813 = vcmp.lt.s32.totalorder %v1781, 200
      %vm1814 = vcmp.lt.s32.totalorder %v1782, 200
      %vm1815 = vcmp.lt.s32.totalorder %v1783, 200
      %vm1816 = vcmp.lt.s32.totalorder %v1784, 200
      %vm1817 = vcmp.lt.s32.totalorder %v1785, 200
      %vm1818 = vcmp.lt.s32.totalorder %v1786, 200
      %v1819 = vsel %vm1787, 1, 0
      %v1820 = vsel %vm1788, 1, 0
      %v1821 = vsel %vm1789, 1, 0
      %v1822 = vsel %vm1790, 1, 0
      %v1823 = vsel %vm1791, 1, 0
      %v1824 = vsel %vm1792, 1, 0
      %v1825 = vsel %vm1793, 1, 0
      %v1826 = vsel %vm1794, 1, 0
      %v1827 = vsel %vm1795, 1, 0
      %v1828 = vsel %vm1796, 1, 0
      %v1829 = vsel %vm1797, 1, 0
      %v1830 = vsel %vm1798, 1, 0
      %v1831 = vsel %vm1799, 1, 0
      %v1832 = vsel %vm1800, 1, 0
      %v1833 = vsel %vm1801, 1, 0
      %v1834 = vsel %vm1802, 1, 0
      %v1835 = vsel %vm1803, 1, 0
      %v1836 = vsel %vm1804, 1, 0
      %v1837 = vsel %vm1805, 1, 0
      %v1838 = vsel %vm1806, 1, 0
      %v1839 = vsel %vm1807, 1, 0
      %v1840 = vsel %vm1808, 1, 0
      %v1841 = vsel %vm1809, 1, 0
      %v1842 = vsel %vm1810, 1, 0
      %v1843 = vsel %vm1811, 1, 0
      %v1844 = vsel %vm1812, 1, 0
      %v1845 = vsel %vm1813, 1, 0
      %v1846 = vsel %vm1814, 1, 0
      %v1847 = vsel %vm1815, 1, 0
      %v1848 = vsel %vm1816, 1, 0
      %v1849 = vsel %vm1817, 1, 0
      %v1850 = vsel %vm1818, 1, 0
      %v1851 = vcvt.s32.f32 %v1819
      %v1852 = vcvt.s32.f32 %v1820
      %v1853 = vcvt.s32.f32 %v1821
      %v1854 = vcvt.s32.f32 %v1822
      %v1855 = vcvt.s32.f32 %v1823
      %v1856 = vcvt.s32.f32 %v1824
      %v1857 = vcvt.s32.f32 %v1825
      %v1858 = vcvt.s32.f32 %v1826
      %v1859 = vcvt.s32.f32 %v1827
      %v1860 = vcvt.s32.f32 %v1828
      %v1861 = vcvt.s32.f32 %v1829
      %v1862 = vcvt.s32.f32 %v1830
      %v1863 = vcvt.s32.f32 %v1831
      %v1864 = vcvt.s32.f32 %v1832
      %v1865 = vcvt.s32.f32 %v1833
      %v1866 = vcvt.s32.f32 %v1834
      %v1867 = vcvt.s32.f32 %v1835
      %v1868 = vcvt.s32.f32 %v1836
      %v1869 = vcvt.s32.f32 %v1837
      %v1870 = vcvt.s32.f32 %v1838
      %v1871 = vcvt.s32.f32 %v1839
      %v1872 = vcvt.s32.f32 %v1840
      %v1873 = vcvt.s32.f32 %v1841
      %v1874 = vcvt.s32.f32 %v1842
      %v1875 = vcvt.s32.f32 %v1843
      %v1876 = vcvt.s32.f32 %v1844
      %v1877 = vcvt.s32.f32 %v1845
      %v1878 = vcvt.s32.f32 %v1846
      %v1879 = vcvt.s32.f32 %v1847
      %v1880 = vcvt.s32.f32 %v1848
      %v1881 = vcvt.s32.f32 %v1849
      %v1882 = vcvt.s32.f32 %v1850
      %v1883 = vmul.f32 %v1628, %v1851
      %v1884 = vmul.f32 %v1631, %v1852
      %v1885 = vmul.f32 %v1636, %v1853
      %v1886 = vmul.f32 %v1639, %v1854
      %v1887 = vmul.f32 %v1644, %v1855
      %v1888 = vmul.f32 %v1647, %v1856
      %v1889 = vmul.f32 %v1652, %v1857
      %v1890 = vmul.f32 %v1655, %v1858
      %v1891 = vmul.f32 %v1660, %v1859
      %v1892 = vmul.f32 %v1663, %v1860
      %v1893 = vmul.f32 %v1668, %v1861
      %v1894 = vmul.f32 %v1671, %v1862
      %v1895 = vmul.f32 %v1676, %v1863
      %v1896 = vmul.f32 %v1679, %v1864
      %v1897 = vmul.f32 %v1684, %v1865
      %v1898 = vmul.f32 %v1687, %v1866
      %v1899 = vmul.f32 %v1692, %v1867
      %v1900 = vmul.f32 %v1695, %v1868
      %v1901 = vmul.f32 %v1700, %v1869
      %v1902 = vmul.f32 %v1703, %v1870
      %v1903 = vmul.f32 %v1708, %v1871
      %v1904 = vmul.f32 %v1711, %v1872
      %v1905 = vmul.f32 %v1716, %v1873
      %v1906 = vmul.f32 %v1719, %v1874
      %v1907 = vmul.f32 %v1724, %v1875
      %v1908 = vmul.f32 %v1727, %v1876
      %v1909 = vmul.f32 %v1732, %v1877
      %v1910 = vmul.f32 %v1735, %v1878
      %v1911 = vmul.f32 %v1740, %v1879
      %v1912 = vmul.f32 %v1743, %v1880
      %v1913 = vmul.f32 %v1748, %v1881
      %v1914 = vmul.f32 %v1751, %v1882
      %v1915 = vadd.f32 %v1883, %v1884
      %v1916 = vadd.f32 %v1915, %v1885
      %v1917 = vadd.f32 %v1916, %v1886
      %v1918 = vadd.f32 %v1917, %v1887
      %v1919 = vadd.f32 %v1918, %v1888
      %v1920 = vadd.f32 %v1919, %v1889
      %v1921 = vadd.f32 %v1920, %v1890
      %v1922 = vadd.f32 %v1921, %v1891
      %v1923 = vadd.f32 %v1922, %v1892
      %v1924 = vadd.f32 %v1923, %v1893
      %v1925 = vadd.f32 %v1924, %v1894
      %v1926 = vadd.f32 %v1925, %v1895
      %v1927 = vadd.f32 %v1926, %v1896
      %v1928 = vadd.f32 %v1927, %v1897
      %v1929 = vadd.f32 %v1928, %v1898
      %v1930 = vadd.f32 %v1929, %v1899
      %v1931 = vadd.f32 %v1930, %v1900
      %v1932 = vadd.f32 %v1931, %v1901
      %v1933 = vadd.f32 %v1932, %v1902
      %v1934 = vadd.f32 %v1933, %v1903
      %v1935 = vadd.f32 %v1934, %v1904
      %v1936 = vadd.f32 %v1935, %v1905
      %v1937 = vadd.f32 %v1936, %v1906
      %v1938 = vadd.f32 %v1937, %v1907
      %v1939 = vadd.f32 %v1938, %v1908
      %v1940 = vadd.f32 %v1939, %v1909
      %v1941 = vadd.f32 %v1940, %v1910
      %v1942 = vadd.f32 %v1941, %v1911
      %v1943 = vadd.f32 %v1942, %v1912
      %v1944 = vadd.f32 %v1943, %v1913
      %v1945 = vadd.f32 %v1944, %v1914
      %v1946 = vrot.slane %v1945, 4
      %v1947 = vadd.f32 %v1945, %v1946
      %v1948 = vrot.slane %v1947, 2
      %v1949 = vadd.f32 %v1947, %v1948
      %v1950 = vrot.slane %v1949, 1
      %v1951 = vadd.f32 %v1949, %v1950
      %v1952 = vmul.f32 %v1951, 0.005
      %v1953 = vsub.f32 %v1628, %v1952
      %v1954 = vsub.f32 %v1631, %v1952
      %v1955 = vsub.f32 %v1636, %v1952
      %v1956 = vsub.f32 %v1639, %v1952
      %v1957 = vsub.f32 %v1644, %v1952
      %v1958 = vsub.f32 %v1647, %v1952
      %v1959 = vsub.f32 %v1652, %v1952
      %v1960 = vsub.f32 %v1655, %v1952
      %v1961 = vsub.f32 %v1660, %v1952
      %v1962 = vsub.f32 %v1663, %v1952
      %v1963 = vsub.f32 %v1668, %v1952
      %v1964 = vsub.f32 %v1671, %v1952
      %v1965 = vsub.f32 %v1676, %v1952
      %v1966 = vsub.f32 %v1679, %v1952
      %v1967 = vsub.f32 %v1684, %v1952
      %v1968 = vsub.f32 %v1687, %v1952
      %v1969 = vsub.f32 %v1692, %v1952
      %v1970 = vsub.f32 %v1695, %v1952
      %v1971 = vsub.f32 %v1700, %v1952
      %v1972 = vsub.f32 %v1703, %v1952
      %v1973 = vsub.f32 %v1708, %v1952
      %v1974 = vsub.f32 %v1711, %v1952
      %v1975 = vsub.f32 %v1716, %v1952
      %v1976 = vsub.f32 %v1719, %v1952
      %v1977 = vsub.f32 %v1724, %v1952
      %v1978 = vsub.f32 %v1727, %v1952
      %v1979 = vsub.f32 %v1732, %v1952
      %v1980 = vsub.f32 %v1735, %v1952
      %v1981 = vsub.f32 %v1740, %v1952
      %v1982 = vsub.f32 %v1743, %v1952
      %v1983 = vsub.f32 %v1748, %v1952
      %v1984 = vsub.f32 %v1751, %v1952
      %v1985 = vmul.f32 %v1953, %v1953
      %v1986 = vmul.f32 %v1954, %v1954
      %v1987 = vmul.f32 %v1955, %v1955
      %v1988 = vmul.f32 %v1956, %v1956
      %v1989 = vmul.f32 %v1957, %v1957
      %v1990 = vmul.f32 %v1958, %v1958
      %v1991 = vmul.f32 %v1959, %v1959
      %v1992 = vmul.f32 %v1960, %v1960
      %v1993 = vmul.f32 %v1961, %v1961
      %v1994 = vmul.f32 %v1962, %v1962
      %v1995 = vmul.f32 %v1963, %v1963
      %v1996 = vmul.f32 %v1964, %v1964
      %v1997 = vmul.f32 %v1965, %v1965
      %v1998 = vmul.f32 %v1966, %v1966
      %v1999 = vmul.f32 %v1967, %v1967
      %v2000 = vmul.f32 %v1968, %v1968
      %v2001 = vmul.f32 %v1969, %v1969
      %v2002 = vmul.f32 %v1970, %v1970
      %v2003 = vmul.f32 %v1971, %v1971
      %v2004 = vmul.f32 %v1972, %v1972
      %v2005 = vmul.f32 %v1973, %v1973
      %v2006 = vmul.f32 %v1974, %v1974
      %v2007 = vmul.f32 %v1975, %v1975
      %v2008 = vmul.f32 %v1976, %v1976
      %v2009 = vmul.f32 %v1977, %v1977
      %v2010 = vmul.f32 %v1978, %v1978
      %v2011 = vmul.f32 %v1979, %v1979
      %v2012 = vmul.f32 %v1980, %v1980
      %v2013 = vmul.f32 %v1981, %v1981
      %v2014 = vmul.f32 %v1982, %v1982
      %v2015 = vmul.f32 %v1983, %v1983
      %v2016 = vmul.f32 %v1984, %v1984
      %v2017 = vmul.f32 %v1985, %v1851
      %v2018 = vmul.f32 %v1986, %v1852
      %v2019 = vmul.f32 %v1987, %v1853
      %v2020 = vmul.f32 %v1988, %v1854
      %v2021 = vmul.f32 %v1989, %v1855
      %v2022 = vmul.f32 %v1990, %v1856
      %v2023 = vmul.f32 %v1991, %v1857
      %v2024 = vmul.f32 %v1992, %v1858
      %v2025 = vmul.f32 %v1993, %v1859
      %v2026 = vmul.f32 %v1994, %v1860
      %v2027 = vmul.f32 %v1995, %v1861
      %v2028 = vmul.f32 %v1996, %v1862
      %v2029 = vmul.f32 %v1997, %v1863
      %v2030 = vmul.f32 %v1998, %v1864
      %v2031 = vmul.f32 %v1999, %v1865
      %v2032 = vmul.f32 %v2000, %v1866
      %v2033 = vmul.f32 %v2001, %v1867
      %v2034 = vmul.f32 %v2002, %v1868
      %v2035 = vmul.f32 %v2003, %v1869
      %v2036 = vmul.f32 %v2004, %v1870
      %v2037 = vmul.f32 %v2005, %v1871
      %v2038 = vmul.f32 %v2006, %v1872
      %v2039 = vmul.f32 %v2007, %v1873
      %v2040 = vmul.f32 %v2008, %v1874
      %v2041 = vmul.f32 %v2009, %v1875
      %v2042 = vmul.f32 %v2010, %v1876
      %v2043 = vmul.f32 %v2011, %v1877
      %v2044 = vmul.f32 %v2012, %v1878
      %v2045 = vmul.f32 %v2013, %v1879
      %v2046 = vmul.f32 %v2014, %v1880
      %v2047 = vmul.f32 %v2015, %v1881
      %v2048 = vmul.f32 %v2016, %v1882
      %v2049 = vadd.f32 %v2017, %v2018
      %v2050 = vadd.f32 %v2049, %v2019
      %v2051 = vadd.f32 %v2050, %v2020
      %v2052 = vadd.f32 %v2051, %v2021
      %v2053 = vadd.f32 %v2052, %v2022
      %v2054 = vadd.f32 %v2053, %v2023
      %v2055 = vadd.f32 %v2054, %v2024
      %v2056 = vadd.f32 %v2055, %v2025
      %v2057 = vadd.f32 %v2056, %v2026
      %v2058 = vadd.f32 %v2057, %v2027
      %v2059 = vadd.f32 %v2058, %v2028
      %v2060 = vadd.f32 %v2059, %v2029
      %v2061 = vadd.f32 %v2060, %v2030
      %v2062 = vadd.f32 %v2061, %v2031
      %v2063 = vadd.f32 %v2062, %v2032
      %v2064 = vadd.f32 %v2063, %v2033
      %v2065 = vadd.f32 %v2064, %v2034
      %v2066 = vadd.f32 %v2065, %v2035
      %v2067 = vadd.f32 %v2066, %v2036
      %v2068 = vadd.f32 %v2067, %v2037
      %v2069 = vadd.f32 %v2068, %v2038
      %v2070 = vadd.f32 %v2069, %v2039
      %v2071 = vadd.f32 %v2070, %v2040
      %v2072 = vadd.f32 %v2071, %v2041
      %v2073 = vadd.f32 %v2072, %v2042
      %v2074 = vadd.f32 %v2073, %v2043
      %v2075 = vadd.f32 %v2074, %v2044
      %v2076 = vadd.f32 %v2075, %v2045
      %v2077 = vadd.f32 %v2076, %v2046
      %v2078 = vadd.f32 %v2077, %v2047
      %v2079 = vadd.f32 %v2078, %v2048
      %v2080 = vrot.slane %v2079, 4
      %v2081 = vadd.f32 %v2079, %v2080
      %v2082 = vrot.slane %v2081, 2
      %v2083 = vadd.f32 %v2081, %v2082
      %v2084 = vrot.slane %v2083, 1
      %v2085 = vadd.f32 %v2083, %v2084
      %v2086 = vmul.f32 %v2085, 0.005
      %v2087 = vadd.f32 %v2086, 1e-05
      %v2088 = vrsqrt.pop %v2087
      %v2089 = vmul.f32 %v1953, %v2088
      %v2090 = vmul.f32 %v1954, %v2088
      %v2091 = vmul.f32 %v1955, %v2088
      %v2092 = vmul.f32 %v1956, %v2088
      %v2093 = vmul.f32 %v1957, %v2088
      %v2094 = vmul.f32 %v1958, %v2088
      %v2095 = vmul.f32 %v1959, %v2088
      %v2096 = vmul.f32 %v1960, %v2088
      %v2097 = vmul.f32 %v1961, %v2088
      %v2098 = vmul.f32 %v1962, %v2088
      %v2099 = vmul.f32 %v1963, %v2088
      %v2100 = vmul.f32 %v1964, %v2088
      %v2101 = vmul.f32 %v1965, %v2088
      %v2102 = vmul.f32 %v1966, %v2088
      %v2103 = vmul.f32 %v1967, %v2088
      %v2104 = vmul.f32 %v1968, %v2088
      %v2105 = vmul.f32 %v1969, %v2088
      %v2106 = vmul.f32 %v1970, %v2088
      %v2107 = vmul.f32 %v1971, %v2088
      %v2108 = vmul.f32 %v1972, %v2088
      %v2109 = vmul.f32 %v1973, %v2088
      %v2110 = vmul.f32 %v1974, %v2088
      %v2111 = vmul.f32 %v1975, %v2088
      %v2112 = vmul.f32 %v1976, %v2088
      %v2113 = vmul.f32 %v1977, %v2088
      %v2114 = vmul.f32 %v1978, %v2088
      %v2115 = vmul.f32 %v1979, %v2088
      %v2116 = vmul.f32 %v1980, %v2088
      %v2117 = vmul.f32 %v1981, %v2088
      %v2118 = vmul.f32 %v1982, %v2088
      %v2119 = vmul.f32 %v1983, %v2088
      %v2120 = vmul.f32 %v1984, %v2088
      %v2121 = vld [vmem:[%s492] sm:$0x1]
      %v2123 = vlaneseq
      %v2124 = vshrl.u32 %v2123, 7
      %v2125 = vsub.s32 0, %v2124
      %v2126 = vrot.slane %v2121, %v2125
      %v2128 = vmul.f32 %v2089, %v2126
      %v2129 = vmul.f32 %v2090, %v2126
      %v2130 = vmul.f32 %v2091, %v2126
      %v2131 = vmul.f32 %v2092, %v2126
      %v2132 = vmul.f32 %v2093, %v2126
      %v2133 = vmul.f32 %v2094, %v2126
      %v2134 = vmul.f32 %v2095, %v2126
      %v2135 = vmul.f32 %v2096, %v2126
      %v2136 = vmul.f32 %v2097, %v2126
      %v2137 = vmul.f32 %v2098, %v2126
      %v2138 = vmul.f32 %v2099, %v2126
      %v2139 = vmul.f32 %v2100, %v2126
      %v2140 = vmul.f32 %v2101, %v2126
      %v2141 = vmul.f32 %v2102, %v2126
      %v2142 = vmul.f32 %v2103, %v2126
      %v2143 = vmul.f32 %v2104, %v2126
      %v2144 = vmul.f32 %v2105, %v2126
      %v2145 = vmul.f32 %v2106, %v2126
      %v2146 = vmul.f32 %v2107, %v2126
      %v2147 = vmul.f32 %v2108, %v2126
      %v2148 = vmul.f32 %v2109, %v2126
      %v2149 = vmul.f32 %v2110, %v2126
      %v2150 = vmul.f32 %v2111, %v2126
      %v2151 = vmul.f32 %v2112, %v2126
      %v2152 = vmul.f32 %v2113, %v2126
      %v2153 = vmul.f32 %v2114, %v2126
      %v2154 = vmul.f32 %v2115, %v2126
      %v2155 = vmul.f32 %v2116, %v2126
      %v2156 = vmul.f32 %v2117, %v2126
      %v2157 = vmul.f32 %v2118, %v2126
      %v2158 = vmul.f32 %v2119, %v2126
      %v2159 = vmul.f32 %v2120, %v2126
      %v2160 = vld [vmem:[%s495] sm:$0x1]
      %v2162 = vlaneseq
      %v2163 = vshrl.u32 %v2162, 7
      %v2164 = vsub.s32 0, %v2163
      %v2165 = vrot.slane %v2160, %v2164
      %v2167 = vadd.f32 %v2128, %v2165
      %v2168 = vadd.f32 %v2129, %v2165
      %v2169 = vadd.f32 %v2130, %v2165
      %v2170 = vadd.f32 %v2131, %v2165
      %v2171 = vadd.f32 %v2132, %v2165
      %v2172 = vadd.f32 %v2133, %v2165
      %v2173 = vadd.f32 %v2134, %v2165
      %v2174 = vadd.f32 %v2135, %v2165
      %v2175 = vadd.f32 %v2136, %v2165
      %v2176 = vadd.f32 %v2137, %v2165
      %v2177 = vadd.f32 %v2138, %v2165
      %v2178 = vadd.f32 %v2139, %v2165
      %v2179 = vadd.f32 %v2140, %v2165
      %v2180 = vadd.f32 %v2141, %v2165
      %v2181 = vadd.f32 %v2142, %v2165
      %v2182 = vadd.f32 %v2143, %v2165
      %v2183 = vadd.f32 %v2144, %v2165
      %v2184 = vadd.f32 %v2145, %v2165
      %v2185 = vadd.f32 %v2146, %v2165
      %v2186 = vadd.f32 %v2147, %v2165
      %v2187 = vadd.f32 %v2148, %v2165
      %v2188 = vadd.f32 %v2149, %v2165
      %v2189 = vadd.f32 %v2150, %v2165
      %v2190 = vadd.f32 %v2151, %v2165
      %v2191 = vadd.f32 %v2152, %v2165
      %v2192 = vadd.f32 %v2153, %v2165
      %v2193 = vadd.f32 %v2154, %v2165
      %v2194 = vadd.f32 %v2155, %v2165
      %v2195 = vadd.f32 %v2156, %v2165
      %v2196 = vadd.f32 %v2157, %v2165
      %v2197 = vadd.f32 %v2158, %v2165
      %v2198 = vadd.f32 %v2159, %v2165
      %p2199 = scmp.eq.s32.totalorder %s24, 2
      %v2200 = vmax.f32 %v2167, 0.0
      %v2201 = vmax.f32 %v2168, 0.0
      %v2202 = vmax.f32 %v2169, 0.0
      %v2203 = vmax.f32 %v2170, 0.0
      %v2204 = vmax.f32 %v2171, 0.0
      %v2205 = vmax.f32 %v2172, 0.0
      %v2206 = vmax.f32 %v2173, 0.0
      %v2207 = vmax.f32 %v2174, 0.0
      %v2208 = vmax.f32 %v2175, 0.0
      %v2209 = vmax.f32 %v2176, 0.0
      %v2210 = vmax.f32 %v2177, 0.0
      %v2211 = vmax.f32 %v2178, 0.0
      %v2212 = vmax.f32 %v2179, 0.0
      %v2213 = vmax.f32 %v2180, 0.0
      %v2214 = vmax.f32 %v2181, 0.0
      %v2215 = vmax.f32 %v2182, 0.0
      %v2216 = vmax.f32 %v2183, 0.0
      %v2217 = vmax.f32 %v2184, 0.0
      %v2218 = vmax.f32 %v2185, 0.0
      %v2219 = vmax.f32 %v2186, 0.0
      %v2220 = vmax.f32 %v2187, 0.0
      %v2221 = vmax.f32 %v2188, 0.0
      %v2222 = vmax.f32 %v2189, 0.0
      %v2223 = vmax.f32 %v2190, 0.0
      %v2224 = vmax.f32 %v2191, 0.0
      %v2225 = vmax.f32 %v2192, 0.0
      %v2226 = vmax.f32 %v2193, 0.0
      %v2227 = vmax.f32 %v2194, 0.0
      %v2228 = vmax.f32 %v2195, 0.0
      %v2229 = vmax.f32 %v2196, 0.0
      %v2230 = vmax.f32 %v2197, 0.0
      %v2231 = vmax.f32 %v2198, 0.0
      %s2232 = scalar_select %p2199, 1, 0
      %v2233 = vstv %s2232
      %vm2234 = vcmp.eq.s32.totalorder %v2233, 1
      %v2235 = vsel %vm2234, %v2167, %v2200
      %v2236 = vsel %vm2234, %v2168, %v2201
      %v2237 = vsel %vm2234, %v2169, %v2202
      %v2238 = vsel %vm2234, %v2170, %v2203
      %v2239 = vsel %vm2234, %v2171, %v2204
      %v2240 = vsel %vm2234, %v2172, %v2205
      %v2241 = vsel %vm2234, %v2173, %v2206
      %v2242 = vsel %vm2234, %v2174, %v2207
      %v2243 = vsel %vm2234, %v2175, %v2208
      %v2244 = vsel %vm2234, %v2176, %v2209
      %v2245 = vsel %vm2234, %v2177, %v2210
      %v2246 = vsel %vm2234, %v2178, %v2211
      %v2247 = vsel %vm2234, %v2179, %v2212
      %v2248 = vsel %vm2234, %v2180, %v2213
      %v2249 = vsel %vm2234, %v2181, %v2214
      %v2250 = vsel %vm2234, %v2182, %v2215
      %v2251 = vsel %vm2234, %v2183, %v2216
      %v2252 = vsel %vm2234, %v2184, %v2217
      %v2253 = vsel %vm2234, %v2185, %v2218
      %v2254 = vsel %vm2234, %v2186, %v2219
      %v2255 = vsel %vm2234, %v2187, %v2220
      %v2256 = vsel %vm2234, %v2188, %v2221
      %v2257 = vsel %vm2234, %v2189, %v2222
      %v2258 = vsel %vm2234, %v2190, %v2223
      %v2259 = vsel %vm2234, %v2191, %v2224
      %v2260 = vsel %vm2234, %v2192, %v2225
      %v2261 = vsel %vm2234, %v2193, %v2226
      %v2262 = vsel %vm2234, %v2194, %v2227
      %v2263 = vsel %vm2234, %v2195, %v2228
      %v2264 = vsel %vm2234, %v2196, %v2229
      %v2265 = vsel %vm2234, %v2197, %v2230
      %v2266 = vsel %vm2234, %v2198, %v2231
      %v2267 = vmul.f32 %v2235, %v1851
      %v2268 = vmul.f32 %v2236, %v1852
      %v2269 = vmul.f32 %v2237, %v1853
      %v2270 = vmul.f32 %v2238, %v1854
      %v2271 = vmul.f32 %v2239, %v1855
      %v2272 = vmul.f32 %v2240, %v1856
      %v2273 = vmul.f32 %v2241, %v1857
      %v2274 = vmul.f32 %v2242, %v1858
      %v2275 = vmul.f32 %v2243, %v1859
      %v2276 = vmul.f32 %v2244, %v1860
      %v2277 = vmul.f32 %v2245, %v1861
      %v2278 = vmul.f32 %v2246, %v1862
      %v2279 = vmul.f32 %v2247, %v1863
      %v2280 = vmul.f32 %v2248, %v1864
      %v2281 = vmul.f32 %v2249, %v1865
      %v2282 = vmul.f32 %v2250, %v1866
      %v2283 = vmul.f32 %v2251, %v1867
      %v2284 = vmul.f32 %v2252, %v1868
      %v2285 = vmul.f32 %v2253, %v1869
      %v2286 = vmul.f32 %v2254, %v1870
      %v2287 = vmul.f32 %v2255, %v1871
      %v2288 = vmul.f32 %v2256, %v1872
      %v2289 = vmul.f32 %v2257, %v1873
      %v2290 = vmul.f32 %v2258, %v1874
      %v2291 = vmul.f32 %v2259, %v1875
      %v2292 = vmul.f32 %v2260, %v1876
      %v2293 = vmul.f32 %v2261, %v1877
      %v2294 = vmul.f32 %v2262, %v1878
      %v2295 = vmul.f32 %v2263, %v1879
      %v2296 = vmul.f32 %v2264, %v1880
      %v2297 = vmul.f32 %v2265, %v1881
      %v2298 = vmul.f32 %v2266, %v1882
      %v2299 = vpack.c.bf16 %v2268, %v2267
      %v2300 = vpack.c.bf16 %v2270, %v2269
      %v2301 = vpack.c.bf16 %v2272, %v2271
      %v2302 = vpack.c.bf16 %v2274, %v2273
      %v2303 = vpack.c.bf16 %v2276, %v2275
      %v2304 = vpack.c.bf16 %v2278, %v2277
      %v2305 = vpack.c.bf16 %v2280, %v2279
      %v2306 = vpack.c.bf16 %v2282, %v2281
      %v2307 = vpack.c.bf16 %v2284, %v2283
      %v2308 = vpack.c.bf16 %v2286, %v2285
      %v2309 = vpack.c.bf16 %v2288, %v2287
      %v2310 = vpack.c.bf16 %v2290, %v2289
      %v2311 = vpack.c.bf16 %v2292, %v2291
      %v2312 = vpack.c.bf16 %v2294, %v2293
      %v2313 = vpack.c.bf16 %v2296, %v2295
      %v2314 = vpack.c.bf16 %v2298, %v2297
      %2315 = vst [vmem:[#allocation3] sm:$0xff] %v2299
      %2316 = vst [vmem:[#allocation3 + $0x8] sm:$0xff] %v2300
      %2317 = vst [vmem:[#allocation3 + $0x10] sm:$0xff] %v2301
      %2318 = vst [vmem:[#allocation3 + $0x18] sm:$0xff] %v2302
      %2319 = vst [vmem:[#allocation3 + $0x20] sm:$0xff] %v2303
      %2320 = vst [vmem:[#allocation3 + $0x28] sm:$0xff] %v2304
      %2321 = vst [vmem:[#allocation3 + $0x30] sm:$0xff] %v2305
      %2322 = vst [vmem:[#allocation3 + $0x38] sm:$0xff] %v2306
      %2323 = vst [vmem:[#allocation3 + $0x40] sm:$0xff] %v2307
      %2324 = vst [vmem:[#allocation3 + $0x48] sm:$0xff] %v2308
      %2325 = vst [vmem:[#allocation3 + $0x50] sm:$0xff] %v2309
      %2326 = vst [vmem:[#allocation3 + $0x58] sm:$0xff] %v2310
      %2327 = vst [vmem:[#allocation3 + $0x60] sm:$0xff] %v2311
      %2328 = vst [vmem:[#allocation3 + $0x68] sm:$0xff] %v2312
      %2329 = vst [vmem:[#allocation3 + $0x70] sm:$0xff] %v2313
      %2330 = vst [vmem:[#allocation3 + $0x78] sm:$0xff] %v2314
      // Predicated region
      $region110: #{gnn_graphpred_forward.1} parent=67 // pred_check
        %p2331 = pneg %p2199
      $region111: #{gnn_graphpred_forward.1} parent=67 // pred_check_branch
        %2333 = sbr.rel (%p2331) target = $region113
      $region112: #{gnn_graphpred_forward.1} parent=67 // pred_region
        %v2334 = vld [vmem:[%s9] sm:$0xff]
        %v2335 = vld [vmem:[#allocation3] sm:$0xff]
        %v2336 = vld [vmem:[#allocation3 + $0x8] sm:$0xff]
        %v2337 = vld [vmem:[#allocation3 + $0x10] sm:$0xff]
        %v2338 = vld [vmem:[#allocation3 + $0x18] sm:$0xff]
        %v2339 = vld [vmem:[#allocation3 + $0x20] sm:$0xff]
        %v2340 = vld [vmem:[#allocation3 + $0x28] sm:$0xff]
        %v2341 = vld [vmem:[#allocation3 + $0x30] sm:$0xff]
        %v2342 = vld [vmem:[#allocation3 + $0x38] sm:$0xff]
        %v2343 = vld [vmem:[#allocation3 + $0x40] sm:$0xff]
        %v2344 = vld [vmem:[#allocation3 + $0x48] sm:$0xff]
        %v2345 = vld [vmem:[#allocation3 + $0x50] sm:$0xff]
        %v2346 = vld [vmem:[#allocation3 + $0x58] sm:$0xff]
        %v2347 = vld [vmem:[#allocation3 + $0x60] sm:$0xff]
        %v2348 = vld [vmem:[#allocation3 + $0x68] sm:$0xff]
        %v2349 = vld [vmem:[#allocation3 + $0x70] sm:$0xff]
        %v2350 = vld [vmem:[#allocation3 + $0x78] sm:$0xff]
        %v2352 = vunpack.c.l.b16 %v2334
        %v2353 = vunpack.c.h.b16 %v2334
        %v2354 = vpack.c.b16 %v2352, %v2352
        %v2355 = vpack.c.b16 %v2353, %v2353
        %2358 = vmatprep.subr.bf16.mxu0 0
        %2359 = vmatpush1.bf16.msra.mxu0 %v2335
        %2360 = vmatprep.subr.bf16.mxu0 0
        %2361 = vmatpush1.bf16.msra.mxu0 %v2336
        %2362 = vmatprep.subr.bf16.mxu0 0
        %2363 = vmatpush1.bf16.msra.mxu0 %v2337
        %2364 = vmatprep.subr.bf16.mxu0 0
        %2365 = vmatpush1.bf16.msra.mxu0 %v2338
        %2366 = vmatprep.subr.bf16.mxu0 0
        %2367 = vmatpush1.bf16.msra.mxu0 %v2339
        %2368 = vmatprep.subr.bf16.mxu0 0
        %2369 = vmatpush1.bf16.msra.mxu0 %v2340
        %2370 = vmatprep.subr.bf16.mxu0 0
        %2371 = vmatpush1.bf16.msra.mxu0 %v2341
        %2372 = vmatprep.subr.bf16.mxu0 0
        %2373 = vmatpush1.bf16.msra.mxu0 %v2342
        %2374 = vmatprep.subr.bf16.mxu0 0
        %2375 = vmatpush1.bf16.msra.mxu0 %v2343
        %2376 = vmatprep.subr.bf16.mxu0 0
        %2377 = vmatpush1.bf16.msra.mxu0 %v2344
        %2378 = vmatprep.subr.bf16.mxu0 0
        %2379 = vmatpush1.bf16.msra.mxu0 %v2345
        %2380 = vmatprep.subr.bf16.mxu0 0
        %2381 = vmatpush1.bf16.msra.mxu0 %v2346
        %2382 = vmatprep.subr.bf16.mxu0 0
        %2383 = vmatpush1.bf16.msra.mxu0 %v2347
        %2384 = vmatprep.subr.bf16.mxu0 0
        %2385 = vmatpush1.bf16.msra.mxu0 %v2348
        %2386 = vmatprep.subr.bf16.mxu0 0
        %2387 = vmatpush1.bf16.msra.mxu0 %v2349
        %2388 = vmatprep.subr.bf16.mxu0 0
        %2389 = vmatpush1.bf16.msra.mxu0 %v2350
        %2390 = vmatprep.mubr.bf16.mxu0 %v2355
        %2391 = vmatmul.mubr.bf16.gmra.mrb[0].mxu0 %v2354
        %v2392 = vpop.f32.mrb[0].mxu0
        %v2393 = vadd.f32 0.0, %v2392
        %v2394 = vpop.f32.mrb[0].mxu0
        %v2395 = vpop.f32.mrb[0].mxu0
        %v2396 = vpop.f32.mrb[0].mxu0
        %2397 = vdwg.mxu0
        %v2398 = vld [vmem:[%s10] sm:$0xff]
        %2400 = vset.pattern.permute.xlu0 0
        %2401 = vperm.xlu0 %2400, %v2398
        %v2402 = vpop.permute.xlu0 %2401
        %v2404 = vmul.f32 %v2393, %v2402
        %v2405 = vld [vmem:[%s11] sm:$0xff]
        %v2406 = vld [vmem:[%s11 + $0x8] sm:$0xff]
        %v2407 = vld [vmem:[%s11 + $0x10] sm:$0xff]
        %v2408 = vld [vmem:[%s11 + $0x18] sm:$0xff]
        %v2409 = vld [vmem:[%s11 + $0x20] sm:$0xff]
        %v2410 = vld [vmem:[%s11 + $0x28] sm:$0xff]
        %v2411 = vld [vmem:[%s11 + $0x30] sm:$0xff]
        %v2412 = vld [vmem:[%s11 + $0x38] sm:$0xff]
        %v2413 = vld [vmem:[%s11 + $0x40] sm:$0xff]
        %v2414 = vld [vmem:[%s11 + $0x48] sm:$0xff]
        %v2415 = vld [vmem:[%s11 + $0x50] sm:$0xff]
        %v2416 = vld [vmem:[%s11 + $0x58] sm:$0xff]
        %v2417 = vld [vmem:[%s11 + $0x60] sm:$0xff]
        %v2418 = vld [vmem:[%s11 + $0x68] sm:$0xff]
        %v2419 = vld [vmem:[%s11 + $0x70] sm:$0xff]
        %v2420 = vld [vmem:[%s11 + $0x78] sm:$0xff]
        %v2421 = vld [vmem:[%s12] sm:$0x1]
        %v2423 = vlaneseq
        %v2424 = vshrl.u32 %v2423, 7
        %v2425 = vsub.s32 0, %v2424
        %v2426 = vrot.slane %v2421, %v2425
        %2428 = vmatprep.subr.mxu0 0.0
        %2429 = vmatpush1.msra.mxu0 %v2405
        %2430 = vmatprep.subr.mxu0 0.0
        %2431 = vmatpush1.msra.mxu0 %v2406
        %2432 = vmatprep.subr.mxu0 0.0
        %2433 = vmatpush1.msra.mxu0 %v2407
        %2434 = vmatprep.subr.mxu0 0.0
        %2435 = vmatpush1.msra.mxu0 %v2408
        %2436 = vmatprep.subr.mxu0 0.0
        %2437 = vmatpush1.msra.mxu0 %v2409
        %2438 = vmatprep.subr.mxu0 0.0
        %2439 = vmatpush1.msra.mxu0 %v2410
        %2440 = vmatprep.subr.mxu0 0.0
        %2441 = vmatpush1.msra.mxu0 %v2411
        %2442 = vmatprep.subr.mxu0 0.0
        %2443 = vmatpush1.msra.mxu0 %v2412
        %2444 = vmatprep.subr.mxu0 0.0
        %2445 = vmatpush1.msra.mxu0 %v2413
        %2446 = vmatprep.subr.mxu0 0.0
        %2447 = vmatpush1.msra.mxu0 %v2414
        %2448 = vmatprep.subr.mxu0 0.0
        %2449 = vmatpush1.msra.mxu0 %v2415
        %2450 = vmatprep.subr.mxu0 0.0
        %2451 = vmatpush1.msra.mxu0 %v2416
        %2452 = vmatprep.subr.mxu0 0.0
        %2453 = vmatpush1.msra.mxu0 %v2417
        %2454 = vmatprep.subr.mxu0 0.0
        %2455 = vmatpush1.msra.mxu0 %v2418
        %2456 = vmatprep.subr.mxu0 0.0
        %2457 = vmatpush1.msra.mxu0 %v2419
        %2458 = vmatprep.subr.mxu0 0.0
        %2459 = vmatpush1.msra.mxu0 %v2420
        %2460 = vmatprep.subr.mxu0 0.0
        %2461 = vmatpush1.msra.mxu0 0.0
        %2462 = vmatprep.subr.mxu0 0.0
        %2463 = vmatpush1.msra.mxu0 0.0
        %2464 = vmatprep.subr.mxu0 0.0
        %2465 = vmatpush1.msra.mxu0 0.0
        %2466 = vmatprep.subr.mxu0 0.0
        %2467 = vmatpush1.msra.mxu0 0.0
        %2468 = vmatprep.subr.mxu0 0.0
        %2469 = vmatpush1.msra.mxu0 0.0
        %2470 = vmatprep.subr.mxu0 0.0
        %2471 = vmatpush1.msra.mxu0 0.0
        %2472 = vmatprep.subr.mxu0 0.0
        %2473 = vmatpush1.msra.mxu0 0.0
        %2474 = vmatprep.subr.mxu0 0.0
        %2475 = vmatpush1.msra.mxu0 0.0
        %2476 = vmatprep.subr.mxu0 0.0
        %2477 = vmatpush1.msra.mxu0 0.0
        %2478 = vmatprep.subr.mxu0 0.0
        %2479 = vmatpush1.msra.mxu0 0.0
        %2480 = vmatprep.subr.mxu0 0.0
        %2481 = vmatpush1.msra.mxu0 0.0
        %2482 = vmatprep.subr.mxu0 0.0
        %2483 = vmatpush1.msra.mxu0 0.0
        %2484 = vmatprep.subr.mxu0 0.0
        %2485 = vmatpush1.msra.mxu0 0.0
        %2486 = vmatprep.subr.mxu0 0.0
        %2487 = vmatpush1.msra.mxu0 0.0
        %2488 = vmatprep.subr.mxu0 0.0
        %2489 = vmatpush1.msra.mxu0 0.0
        %2490 = vmatprep.subr.mxu0 0.0
        %2491 = vmatpush1.msra.mxu0 0.0
        %2492 = vmatprep.mubr.f32.mxu0 0.0
        %2493 = vmatmul.mubr.f32.gmra.mrb[0].mxu0 %v2404
        %v2494 = vpop.f32.mrb[0].mxu0
        %v2495 = vadd.f32 %v2426, %v2494
        %v2496 = vpop.f32.mrb[0].mxu0
        %2497 = vdwg.mxu0
        %2498 = vst [vmem:[%s13] sm:$0xff] %v2495
      $region113: #{gnn_graphpred_forward.1} parent=67 // pred_fallthru
        _
      // Predicated region
      $region114: #{gnn_graphpred_forward.1} parent=67 // pred_check
        %p2499 = pneg %p324
      $region115: #{gnn_graphpred_forward.1} parent=67 // pred_check_branch
        %2501 = sbr.rel (%p2499) target = $region117
      $region116: #{gnn_graphpred_forward.1} parent=67 // pred_region
        _
      $region117: #{gnn_graphpred_forward.1} parent=67 // pred_fallthru
        _
      // Predicated region
      $region118: #{gnn_graphpred_forward.1} parent=67 // pred_check
        %p2502 = pneg %p324
      $region119: #{gnn_graphpred_forward.1} parent=67 // pred_check_branch
        %2504 = sbr.rel (%p2502) target = $region121
      $region120: #{gnn_graphpred_forward.1} parent=67 // pred_region
        _
      $region121: #{gnn_graphpred_forward.1} parent=67 // pred_fallthru
        _
    $region68: #{gnn_graphpred_forward.1} parent=5 // pred_fallthru
      _
    %p2505 = scmp.le.s32.totalorder 2, %s19
    // Predicated region
    $region122: #{gnn_graphpred_forward.1} parent=5 // pred_check
      %p2506 = pneg %p2505
    $region123: #{gnn_graphpred_forward.1} parent=5 // pred_check_branch
      %2508 = sbr.rel (%p2506) target = $region125
    $region124: #{gnn_graphpred_forward.1} parent=5 // pred_region
      %s2509 = ssub.s32 %s19, 2
    $region125: #{gnn_graphpred_forward.1} parent=5 // pred_fallthru
      _
  $region6: #{gnn_graphpred_forward.1} parent=0 // loop_footer
    %s23 = sadd.s32 1, %s19
  $region7: #{gnn_graphpred_forward.1} parent=0 // loop_footer_branch
    %18 = sbr.rel target = $region3
  $region8: #{gnn_graphpred_forward.1} parent=0 // loop_exit
    _
  %2510 = vsyncmov [#allocation4]
  %s2511 = vpop.sfrf %2510
  %p2512 = scmp.eq.s32.totalorder %s2511, 0
  %p2513 = pneg %p2512
  %2515 = shalt.err (%p2513)

</llo_original>
